<compile_context>
chip_gen: v5e
topology: v5e:2x2
jax: 0.10.0
libtpu: 0.0.40
codegen_flags: <defaults>
</compile_context>

<pallas_src>
import functools
import math

import jax
import jax.numpy as jnp
from jax import lax
from jax.experimental import pallas as pl
from jax.experimental.pallas import tpu as pltpu

EPS = 1e-5  # config.layer_norm_epsilon


def _rmsnorm(x, w, eps=EPS):
    ms = jnp.mean(x * x, axis=-1, keepdims=True)
    return x * lax.rsqrt(ms + eps) * w


# ---------------------------------------------------------------------------
# Whole transformer stack: grid = (B, L).  Layer axis is a sequential carry in
# VMEM scratch; per-layer weights are streamed (double-buffered) by BlockSpec.
# ---------------------------------------------------------------------------
def block_kernel(x_ref, ln1_ref, ln2_ref, caw_ref, cab_ref,
                 fcw_ref, fcb_ref, pw_ref, pb_ref,
                 skipc_ref, centrec_ref, projv_ref,
                 xo_ref, pk_ref, pv_ref,
                 h_scr,
                 *, n_head, d_head, parallel):
    layer = pl.program_id(1)

    @pl.when(layer == 0)
    def _():
        h_scr[...] = x_ref[0]                       # load embeddings once per batch elem

    x = h_scr[...]                                  # (T, D) f32 carried hidden state
    T, D = x.shape

    # ----- attention branch -------------------------------------------------
    h1 = _rmsnorm(x, ln1_ref[0, 0])                 # (T, D) f32
    h1b = h1.astype(jnp.bfloat16)

    # c_attn: Conv1D(2*D, D) -> query | key   (bf16 MXU, f32 accumulate)
    qk = jnp.dot(h1b, caw_ref[0], preferred_element_type=jnp.float32) + cab_ref[0, 0]
    q = qk[:, :D]
    k = qk[:, D:]

    # present: lane-dense (T, D) slabs; wrapper reshapes to (B, H, T, d_head)
    pk_ref[0, 0] = k
    pv_ref[0, 0] = h1

    # causal structures generated in-kernel (no (T,T) HBM inputs)
    row = lax.broadcasted_iota(jnp.int32, (T, T), 0)
    col = lax.broadcasted_iota(jnp.int32, (T, T), 1)
    causal = row >= col
    unif = jnp.where(causal, 1.0 / (row.astype(jnp.float32) + 1.0), 0.0)

    # hoisted centre term: uniform_causal @ V for ALL heads in one lane-dense matmul
    u_all = jnp.dot(unif.astype(jnp.bfloat16), h1b,
                    preferred_element_type=jnp.float32)       # (T, D) f32

    # scale folded into q once (self.scale=True -> 1/sqrt(d_head))
    scale = 1.0 / math.sqrt(d_head)
    qb = (q * scale).astype(jnp.bfloat16)
    kb = k.astype(jnp.bfloat16)

    parts = []
    for h in range(n_head):                        # static unrolled; 2 MXU matmuls/head
        sl = slice(h * d_head, (h + 1) * d_head)
        s = lax.dot_general(qb[:, sl], kb[:, sl], (((1,), (1,)), ((), ())),
                            preferred_element_type=jnp.float32)      # (T, T) f32
        s = jnp.where(causal, s, -1e10)                              # f32 masking
        w = jax.nn.softmax(s, axis=-1)                               # f32 softmax
        parts.append(jnp.dot(w.astype(jnp.bfloat16), h1b[:, sl],
                             preferred_element_type=jnp.float32))    # (T, d_head)
    a_att = jnp.concatenate(parts, axis=-1)                          # (T, D) f32

    # post-softmax bias applied algebraically on lane-dense (T, D):
    #   (W + skip*I - centre*U) @ V  ==  W@V + skip*V - centre*(U@V)
    a = (a_att + skipc_ref[0, 0] * h1 - centrec_ref[0, 0] * u_all) * projv_ref[layer]

    # ----- parallel MLP branch ----------------------------------------------
    mlp_in = _rmsnorm(x if parallel else a, ln2_ref[0, 0])
    fc = jnp.dot(mlp_in.astype(jnp.bfloat16), fcw_ref[0],
                 preferred_element_type=jnp.float32) + fcb_ref[0, 0]
    fc = jnp.maximum(fc, 0.0)                       # LeakyReLU(0) == ReLU
    m = jnp.dot(fc.astype(jnp.bfloat16), pw_ref[0],
                preferred_element_type=jnp.float32) + pb_ref[0, 0]

    h_new = a + m                                   # skipless: no residual add of x
    h_scr[...] = h_new

    @pl.when(layer == pl.num_programs(1) - 1)
    def _():
        xo_ref[0] = h_new                           # only the final hidden hits HBM


def run_blocks(x, p, skipc, centrec, n_head, parallel):
    B, T, D = x.shape
    L = p["caw"].shape[0]
    d_head = D // n_head
    kern = functools.partial(block_kernel, n_head=n_head, d_head=d_head,
                             parallel=parallel)

    def per_layer(shape):
        nd = len(shape)
        return pl.BlockSpec((1,) + tuple(shape[1:]),
                            lambda b, l, _nd=nd: (l,) + (0,) * (_nd - 1))

    in_specs = [
        pl.BlockSpec((1, T, D), lambda b, l: (b, 0, 0)),           # embeddings
        per_layer((L, 1, D)), per_layer((L, 1, D)),                # ln1, ln2
        per_layer((L, D, 2 * D)), per_layer((L, 1, 2 * D)),        # c_attn w, b
        per_layer((L, D, 4 * D)), per_layer((L, 1, 4 * D)),        # c_fc  w, b
        per_layer((L, 4 * D, D)), per_layer((L, 1, D)),            # c_proj w, b
        per_layer((L, 1, D)), per_layer((L, 1, D)),                # skip / centre cols
        pl.BlockSpec(memory_space=pltpu.MemorySpace.SMEM),         # proj_value (L,)
    ]
    out_specs = (
        pl.BlockSpec((1, T, D), lambda b, l: (b, 0, 0)),           # final hidden
        pl.BlockSpec((1, 1, T, D), lambda b, l: (l, b, 0, 0)),     # present keys
        pl.BlockSpec((1, 1, T, D), lambda b, l: (l, b, 0, 0)),     # present values
    )
    out_shape = (
        jax.ShapeDtypeStruct((B, T, D), jnp.float32),
        jax.ShapeDtypeStruct((L, B, T, D), jnp.float32),
        jax.ShapeDtypeStruct((L, B, T, D), jnp.float32),
    )

    # explicit VMEM budget (double-buffered blocks + in-kernel temporaries), capped
    # to v7x physical (64 MiB) and floored at a safe 32 MiB.
    blk_bytes = (4 * T * D * 4                     # x, xo, pk, pv blocks (f32)
                 + 2 * (2 + 4 + 4) * D * D         # bf16 weight blocks
                 + 16 * D * 4                      # per-layer bias / gain vectors
                 + n_head * T * T * 8              # per-head scores + probs
                 + T * 4 * D * 8                   # fc intermediate
                 + 4 * T * D * 4)                  # misc activations
    vmem_limit = int(min(64 * 2 ** 20, max(32 * 2 ** 20, 3 * blk_bytes)))

    return pl.pallas_call(
        kern,
        out_shape=out_shape,
        grid=(B, L),
        in_specs=in_specs,
        out_specs=out_specs,
        scratch_shapes=[pltpu.VMEM((T, D), jnp.float32)],          # hidden-state carry
        compiler_params=pltpu.CompilerParams(
            dimension_semantics=("parallel", "arbitrary"),
            vmem_limit_bytes=vmem_limit),
    )(x, p["ln1"], p["ln2"], p["caw"], p["cab"],
      p["fcw"], p["fcb"], p["pw"], p["pb"],
      skipc, centrec, p["projv"])


# ---------------------------------------------------------------------------
# Final RMSNorm + tied LM head, tiled over the vocab dimension.
# logits = rmsnorm(h, ln_f) @ wte^T  (wte pre-transposed to (D, V), bf16)
# ---------------------------------------------------------------------------
def lm_head_kernel(x_ref, lnf_ref, wt_ref, out_ref):
    h = _rmsnorm(x_ref[0], lnf_ref[0]).astype(jnp.bfloat16)
    out_ref[0] = jnp.dot(h, wt_ref[...], preferred_element_type=jnp.float32)


def _vocab_tile(v):
    if v % 128 == 0:
        for cand in (2048, 1024, 512, 256, 128):
            if v % cand == 0:
                return cand
    return v                                        # small vocabs: single full block


def run_lm_head(x, lnf_w, wte):
    B, T, D = x.shape
    V = wte.shape[0]
    tv = _vocab_tile(V)
    wte_t = jnp.transpose(wte).astype(jnp.bfloat16)  # (D, V): lane-dense RHS tiles

    blk_bytes = T * D * 4 + D * 4 + D * tv * 2 + T * tv * 4
    vmem_limit = int(min(64 * 2 ** 20, max(32 * 2 ** 20, 4 * blk_bytes)))

    return pl.pallas_call(
        lm_head_kernel,
        out_shape=jax.ShapeDtypeStruct((B, T, V), jnp.float32),
        grid=(B, V // tv),
        in_specs=[
            pl.BlockSpec((1, T, D), lambda b, v: (b, 0, 0)),
            pl.BlockSpec((1, D), lambda b, v: (0, 0)),
            pl.BlockSpec((D, tv), lambda b, v: (0, v)),
        ],
        out_specs=pl.BlockSpec((1, T, tv), lambda b, v: (b, 0, v)),
        compiler_params=pltpu.CompilerParams(
            dimension_semantics=("parallel", "parallel"),
            vmem_limit_bytes=vmem_limit),
    )(x, lnf_w, wte_t)


# ---------------------------------------------------------------------------
# Parameter init (deterministic, synthetic; weights stored bf16) + forward
# ---------------------------------------------------------------------------
def init_params(key, cfg):
    D, H = cfg["n_embd"], cfg["n_head"]
    V, P, L = cfg["vocab_size"], cfg["n_positions"], cfg["n_layer"]
    keys = jax.random.split(key, 2 + 3 * L)
    params = {
        "wte": (0.02 * jax.random.normal(keys[0], (V, D), jnp.float32)).astype(jnp.bfloat16),
        "wpe": (0.02 * jax.random.normal(keys[1], (P, D), jnp.float32)).astype(jnp.bfloat16),
        "ln_f": jnp.ones((1, D), jnp.float32),
        "ln1": jnp.ones((L, 1, D), jnp.float32),
        "ln2": jnp.ones((L, 1, D), jnp.float32),
        "cab": jnp.zeros((L, 1, 2 * D), jnp.float32),
        "fcb": jnp.zeros((L, 1, 4 * D), jnp.float32),
        "pb": jnp.zeros((L, 1, D), jnp.float32),
        "skip": jnp.ones((L, H), jnp.float32),      # attn_mat_skip_gain
        "centre": jnp.ones((L, H), jnp.float32),    # centre_attn_gain
        "projv": jnp.ones((L,), jnp.float32),       # proj_value
    }
    caw, fcw, pw = [], [], []
    for l in range(L):
        k0, k1, k2 = keys[2 + 3 * l: 5 + 3 * l]
        caw.append(0.02 * jax.random.normal(k0, (D, 2 * D), jnp.float32))
        fcw.append(0.02 * jax.random.normal(k1, (D, 4 * D), jnp.float32))
        pw.append(0.02 * jax.random.normal(k2, (4 * D, D), jnp.float32))
    params["caw"] = jnp.stack(caw).astype(jnp.bfloat16)
    params["fcw"] = jnp.stack(fcw).astype(jnp.bfloat16)
    params["pw"] = jnp.stack(pw).astype(jnp.bfloat16)
    return params


def skipless_lm_head_forward(params, input_ids, cfg):
    B, T = input_ids.shape
    D, H, L = cfg["n_embd"], cfg["n_head"], cfg["n_layer"]
    d_head = D // H

    pos_ids = jnp.arange(T, dtype=jnp.int32)
    hidden = (params["wte"][input_ids]
              + params["wpe"][pos_ids][None, :, :]).astype(jnp.float32)   # (B,T,D)

    # per-head gains expanded to lane-dense rows (head h -> columns h*d:(h+1)*d)
    skipc = jnp.repeat(params["skip"], d_head, axis=-1)[:, None, :]       # (L,1,D)
    centrec = jnp.repeat(params["centre"], d_head, axis=-1)[:, None, :]   # (L,1,D)

    hidden, pk, pv = run_blocks(hidden, params, skipc, centrec, H, cfg["parallel"])

    # presents: per-layer (2, B, H, T, d_head) — split heads from lane-dense slabs
    pk_h = pk.reshape(L, B, T, H, d_head).transpose(0, 1, 3, 2, 4)
    pv_h = pv.reshape(L, B, T, H, d_head).transpose(0, 1, 3, 2, 4)
    presents = [jnp.stack([pk_h[l], pv_h[l]], axis=0) for l in range(L)]

    logits = run_lm_head(hidden, params["ln_f"], params["wte"])
    return logits, presents


if __name__ == "__main__":
    cfg = dict(vocab_size=64, n_positions=16, n_ctx=16, max_positions=16,
               n_embd=32, n_head=4, n_layer=2, parallel=True,
               layer_norm_epsilon=EPS)

    key = jax.random.PRNGKey(0)
    pkey, ikey = jax.random.split(key)
    params = init_params(pkey, cfg)

    B, T = 2, 8
    input_ids = jax.random.randint(ikey, (B, T), 0, cfg["vocab_size"], dtype=jnp.int32)

    logits, presents = skipless_lm_head_forward(params, input_ids, cfg)
    logits = jax.block_until_ready(logits)
    for p in presents:
        jax.block_until_ready(p)

    d_head = cfg["n_embd"] // cfg["n_head"]
    assert logits.shape == (B, T, cfg["vocab_size"])
    assert all(p.shape == (2, B, cfg["n_head"], T, d_head) for p in presents)
    assert bool(jnp.isfinite(logits).all())
    print("KERNEL_OK")
</pallas_src>

<mosaic_0001>
module attributes {stable_mosaic.version = 11 : i64} {
  func.func @block_kernel(%arg0: i32, %arg1: i32, %arg2: memref<1x8x32xf32, #tpu.memory_space<vmem>>, %arg3: memref<1x1x32xf32, #tpu.memory_space<vmem>>, %arg4: memref<1x1x32xf32, #tpu.memory_space<vmem>>, %arg5: memref<1x32x64xbf16, #tpu.memory_space<vmem>>, %arg6: memref<1x1x64xf32, #tpu.memory_space<vmem>>, %arg7: memref<1x32x128xbf16, #tpu.memory_space<vmem>>, %arg8: memref<1x1x128xf32, #tpu.memory_space<vmem>>, %arg9: memref<1x128x32xbf16, #tpu.memory_space<vmem>>, %arg10: memref<1x1x32xf32, #tpu.memory_space<vmem>>, %arg11: memref<1x1x32xf32, #tpu.memory_space<vmem>>, %arg12: memref<1x1x32xf32, #tpu.memory_space<vmem>>, %arg13: memref<2xf32, #tpu.memory_space<smem>>, %arg14: memref<1x8x32xf32, #tpu.memory_space<vmem>>, %arg15: memref<1x1x8x32xf32, #tpu.memory_space<vmem>>, %arg16: memref<1x1x8x32xf32, #tpu.memory_space<vmem>>, %arg17: memref<8x32xf32, #tpu.memory_space<vmem>>) attributes {dimension_semantics = [#tpu.dimension_semantics<parallel>, #tpu.dimension_semantics<arbitrary>], iteration_bounds = array<i64: 2, 2>, scalar_prefetch = 0 : i64, scratch_operands = 1 : i64, tpu.core_type = #tpu.core_type<tc>, window_params = [{transform_indices = @transform_0, window_bounds = array<i64: 1, 8, 32>}, {transform_indices = @transform_1, window_bounds = array<i64: 1, 1, 32>}, {transform_indices = @transform_2, window_bounds = array<i64: 1, 1, 32>}, {transform_indices = @transform_3, window_bounds = array<i64: 1, 32, 64>}, {transform_indices = @transform_4, window_bounds = array<i64: 1, 1, 64>}, {transform_indices = @transform_5, window_bounds = array<i64: 1, 32, 128>}, {transform_indices = @transform_6, window_bounds = array<i64: 1, 1, 128>}, {transform_indices = @transform_7, window_bounds = array<i64: 1, 128, 32>}, {transform_indices = @transform_8, window_bounds = array<i64: 1, 1, 32>}, {transform_indices = @transform_9, window_bounds = array<i64: 1, 1, 32>}, {transform_indices = @transform_10, window_bounds = array<i64: 1, 1, 32>}, {transform_indices = @transform_11, window_bounds = array<i64: 2>}, {transform_indices = @transform_12, window_bounds = array<i64: 1, 8, 32>}, {transform_indices = @transform_13, window_bounds = array<i64: 1, 1, 8, 32>}, {transform_indices = @transform_14, window_bounds = array<i64: 1, 1, 8, 32>}]} {
    %c0_i32 = arith.constant 0 : i32
    %0 = arith.cmpi eq, %arg1, %c0_i32 : i32
    %1 = arith.extui %0 : i1 to i32
    %c0_i32_0 = arith.constant 0 : i32
    %2 = arith.cmpi ne, %1, %c0_i32_0 : i32
    scf.if %2 {
      %c0_81 = arith.constant 0 : index
      %c0_82 = arith.constant 0 : index
      %c0_83 = arith.constant 0 : index
      %185 = vector.load %arg2[%c0_81, %c0_82, %c0_83] : memref<1x8x32xf32, #tpu.memory_space<vmem>>, vector<1x8x32xf32>
      %186 = vector.shape_cast %185 : vector<1x8x32xf32> to vector<8x32xf32>
      %c0_84 = arith.constant 0 : index
      %c0_85 = arith.constant 0 : index
      %187 = vector.load %arg17[%c0_84, %c0_85] : memref<8x32xf32, #tpu.memory_space<vmem>>, vector<8x32xf32>
      tpu.vector_store %arg17[%c0_84, %c0_85], %186 {strides = array<i32>} : memref<8x32xf32, #tpu.memory_space<vmem>>, vector<8x32xf32>,
    } else {
    }
    %c0 = arith.constant 0 : index
    %c0_1 = arith.constant 0 : index
    %3 = vector.load %arg17[%c0, %c0_1] : memref<8x32xf32, #tpu.memory_space<vmem>>, vector<8x32xf32>
    %c0_2 = arith.constant 0 : index
    %c0_3 = arith.constant 0 : index
    %c0_4 = arith.constant 0 : index
    %4 = vector.load %arg3[%c0_2, %c0_3, %c0_4] : memref<1x1x32xf32, #tpu.memory_space<vmem>>, vector<1x1x32xf32>
    %5 = vector.shape_cast %4 : vector<1x1x32xf32> to vector<32xf32>
    %6 = arith.mulf %3, %3 : vector<8x32xf32>
    %cst = arith.constant dense<0.000000e+00> : vector<8xf32>
    %7 = vector.multi_reduction <add>, %6, %cst [1] : vector<8x32xf32> to vector<8xf32>
    %8 = vector.shape_cast %7 : vector<8xf32> to vector<8x1xf32>
    %cst_5 = arith.constant 3.200000e+01 : f32
    %9 = vector.broadcast %cst_5 : f32 to vector<8x1xf32>
    %10 = arith.divf %8, %9 : vector<8x1xf32>
    %cst_6 = arith.constant 9.99999974E-6 : f32
    %11 = vector.broadcast %cst_6 : f32 to vector<8x1xf32>
    %12 = arith.addf %10, %11 : vector<8x1xf32>
    %13 = math.rsqrt %12 : vector<8x1xf32>
    %14 = vector.broadcast %13 : vector<8x1xf32> to vector<8x32xf32>
    %15 = arith.mulf %3, %14 : vector<8x32xf32>
    %16 = vector.shape_cast %5 : vector<32xf32> to vector<1x32xf32>
    %17 = vector.broadcast %16 : vector<1x32xf32> to vector<8x32xf32>
    %18 = arith.mulf %15, %17 : vector<8x32xf32>
    %19 = arith.truncf %18 : vector<8x32xf32> to vector<8x32xbf16>
    %c0_7 = arith.constant 0 : index
    %c0_8 = arith.constant 0 : index
    %c0_9 = arith.constant 0 : index
    %20 = vector.load %arg5[%c0_7, %c0_8, %c0_9] : memref<1x32x64xbf16, #tpu.memory_space<vmem>>, vector<1x32x64xbf16>
    %21 = vector.shape_cast %20 : vector<1x32x64xbf16> to vector<32x64xbf16>
    %cst_10 = arith.constant dense<0.000000e+00> : vector<8x64xf32>
    %22 = tpu.matmul %19, %21, %cst_10 {dimension_numbers = #tpu.dot_dimension_numbers<[1], [0], [0], [1], [0, 0, 1, 1], [], []>} : vector<8x32xbf16>, vector<32x64xbf16>, vector<8x64xf32> -> vector<8x64xf32>
    %c0_11 = arith.constant 0 : index
    %c0_12 = arith.constant 0 : index
    %c0_13 = arith.constant 0 : index
    %23 = vector.load %arg6[%c0_11, %c0_12, %c0_13] : memref<1x1x64xf32, #tpu.memory_space<vmem>>, vector<1x1x64xf32>
    %24 = vector.shape_cast %23 : vector<1x1x64xf32> to vector<64xf32>
    %25 = vector.shape_cast %24 : vector<64xf32> to vector<1x64xf32>
    %26 = vector.broadcast %25 : vector<1x64xf32> to vector<8x64xf32>
    %27 = arith.addf %22, %26 : vector<8x64xf32>
    %28 = vector.extract_strided_slice %27 {offsets = [0, 0], sizes = [8, 32], strides = [1, 1]} : vector<8x64xf32> to vector<8x32xf32>
    %29 = vector.extract_strided_slice %27 {offsets = [0, 32], sizes = [8, 32], strides = [1, 1]} : vector<8x64xf32> to vector<8x32xf32>
    %c0_14 = arith.constant 0 : index
    %c0_15 = arith.constant 0 : index
    %c0_16 = arith.constant 0 : index
    %c0_17 = arith.constant 0 : index
    %30 = vector.load %arg15[%c0_14, %c0_15, %c0_16, %c0_17] : memref<1x1x8x32xf32, #tpu.memory_space<vmem>>, vector<1x1x8x32xf32>
    %31 = vector.shape_cast %30 : vector<1x1x8x32xf32> to vector<8x32xf32>
    %32 = vector.shape_cast %29 : vector<8x32xf32> to vector<1x1x8x32xf32>
    tpu.vector_store %arg15[%c0_14, %c0_15, %c0_16, %c0_17], %32 {strides = array<i32>} : memref<1x1x8x32xf32, #tpu.memory_space<vmem>>, vector<1x1x8x32xf32>,
    %c0_18 = arith.constant 0 : index
    %c0_19 = arith.constant 0 : index
    %c0_20 = arith.constant 0 : index
    %c0_21 = arith.constant 0 : index
    %33 = vector.load %arg16[%c0_18, %c0_19, %c0_20, %c0_21] : memref<1x1x8x32xf32, #tpu.memory_space<vmem>>, vector<1x1x8x32xf32>
    %34 = vector.shape_cast %33 : vector<1x1x8x32xf32> to vector<8x32xf32>
    %35 = vector.shape_cast %18 : vector<8x32xf32> to vector<1x1x8x32xf32>
    tpu.vector_store %arg16[%c0_18, %c0_19, %c0_20, %c0_21], %35 {strides = array<i32>} : memref<1x1x8x32xf32, #tpu.memory_space<vmem>>, vector<1x1x8x32xf32>,
    %36 = tpu.iota {dimensions = array<i32: 0>} : vector<8x8xi32>
    %37 = tpu.iota {dimensions = array<i32: 1>} : vector<8x8xi32>
    %38 = arith.cmpi sge, %36, %37 : vector<8x8xi32>
    %39 = arith.sitofp %36 : vector<8x8xi32> to vector<8x8xf32>
    %cst_22 = arith.constant 1.000000e+00 : f32
    %40 = vector.broadcast %cst_22 : f32 to vector<8x8xf32>
    %41 = arith.addf %39, %40 : vector<8x8xf32>
    %cst_23 = arith.constant 1.000000e+00 : f32
    %42 = vector.broadcast %cst_23 : f32 to vector<8x8xf32>
    %43 = arith.divf %42, %41 : vector<8x8xf32>
    %cst_24 = arith.constant 0.000000e+00 : f32
    %44 = vector.broadcast %cst_24 : f32 to vector<8x8xf32>
    %45 = arith.select %38, %43, %44 : vector<8x8xi1>, vector<8x8xf32>
    %46 = arith.truncf %45 : vector<8x8xf32> to vector<8x8xbf16>
    %cst_25 = arith.constant dense<0.000000e+00> : vector<8x32xf32>
    %47 = tpu.matmul %46, %19, %cst_25 {dimension_numbers = #tpu.dot_dimension_numbers<[1], [0], [0], [1], [0, 0, 1, 1], [], []>} : vector<8x8xbf16>, vector<8x32xbf16>, vector<8x32xf32> -> vector<8x32xf32>
    %cst_26 = arith.constant 0.353553385 : f32
    %48 = vector.broadcast %cst_26 : f32 to vector<8x32xf32>
    %49 = arith.mulf %28, %48 : vector<8x32xf32>
    %50 = arith.truncf %49 : vector<8x32xf32> to vector<8x32xbf16>
    %51 = arith.truncf %29 : vector<8x32xf32> to vector<8x32xbf16>
    %52 = vector.extract_strided_slice %50 {offsets = [0, 0], sizes = [8, 8], strides = [1, 1]} : vector<8x32xbf16> to vector<8x8xbf16>
    %53 = vector.extract_strided_slice %51 {offsets = [0, 0], sizes = [8, 8], strides = [1, 1]} : vector<8x32xbf16> to vector<8x8xbf16>
    %cst_27 = arith.constant dense<0.000000e+00> : vector<8x8xf32>
    %54 = tpu.matmul %52, %53, %cst_27 {dimension_numbers = #tpu.dot_dimension_numbers<[1], [1], [0], [0], [0, 0, 1, 0], [], []>} : vector<8x8xbf16>, vector<8x8xbf16>, vector<8x8xf32> -> vector<8x8xf32>
    %cst_28 = arith.constant -1.000000e+10 : f32
    %55 = vector.broadcast %cst_28 : f32 to vector<8x8xf32>
    %56 = arith.select %38, %54, %55 : vector<8x8xi1>, vector<8x8xf32>
    %cst_29 = arith.constant dense<0xFF800000> : vector<8xf32>
    %57 = vector.multi_reduction <maximumf>, %56, %cst_29 [1] : vector<8x8xf32> to vector<8xf32>
    %cst_30 = arith.constant 0xFF800000 : f32
    %58 = vector.broadcast %cst_30 : f32 to vector<8xf32>
    %59 = arith.maximumf %58, %57 : vector<8xf32>
    %60 = vector.shape_cast %59 : vector<8xf32> to vector<8x1xf32>
    %61 = vector.broadcast %60 : vector<8x1xf32> to vector<8x8xf32>
    %62 = arith.subf %56, %61 : vector<8x8xf32>
    %63 = math.exp %62 : vector<8x8xf32>
    %cst_31 = arith.constant dense<0.000000e+00> : vector<8xf32>
    %64 = vector.multi_reduction <add>, %63, %cst_31 [1] : vector<8x8xf32> to vector<8xf32>
    %65 = vector.shape_cast %64 : vector<8xf32> to vector<8x1xf32>
    %66 = vector.broadcast %65 : vector<8x1xf32> to vector<8x8xf32>
    %67 = arith.divf %63, %66 : vector<8x8xf32>
    %68 = arith.truncf %67 : vector<8x8xf32> to vector<8x8xbf16>
    %69 = vector.extract_strided_slice %19 {offsets = [0, 0], sizes = [8, 8], strides = [1, 1]} : vector<8x32xbf16> to vector<8x8xbf16>
    %cst_32 = arith.constant dense<0.000000e+00> : vector<8x8xf32>
    %70 = tpu.matmul %68, %69, %cst_32 {dimension_numbers = #tpu.dot_dimension_numbers<[1], [0], [0], [1], [0, 0, 1, 1], [], []>} : vector<8x8xbf16>, vector<8x8xbf16>, vector<8x8xf32> -> vector<8x8xf32>
    %71 = vector.extract_strided_slice %50 {offsets = [0, 8], sizes = [8, 8], strides = [1, 1]} : vector<8x32xbf16> to vector<8x8xbf16>
    %72 = vector.extract_strided_slice %51 {offsets = [0, 8], sizes = [8, 8], strides = [1, 1]} : vector<8x32xbf16> to vector<8x8xbf16>
    %cst_33 = arith.constant dense<0.000000e+00> : vector<8x8xf32>
    %73 = tpu.matmul %71, %72, %cst_33 {dimension_numbers = #tpu.dot_dimension_numbers<[1], [1], [0], [0], [0, 0, 1, 0], [], []>} : vector<8x8xbf16>, vector<8x8xbf16>, vector<8x8xf32> -> vector<8x8xf32>
    %cst_34 = arith.constant -1.000000e+10 : f32
    %74 = vector.broadcast %cst_34 : f32 to vector<8x8xf32>
    %75 = arith.select %38, %73, %74 : vector<8x8xi1>, vector<8x8xf32>
    %cst_35 = arith.constant dense<0xFF800000> : vector<8xf32>
    %76 = vector.multi_reduction <maximumf>, %75, %cst_35 [1] : vector<8x8xf32> to vector<8xf32>
    %cst_36 = arith.constant 0xFF800000 : f32
    %77 = vector.broadcast %cst_36 : f32 to vector<8xf32>
    %78 = arith.maximumf %77, %76 : vector<8xf32>
    %79 = vector.shape_cast %78 : vector<8xf32> to vector<8x1xf32>
    %80 = vector.broadcast %79 : vector<8x1xf32> to vector<8x8xf32>
    %81 = arith.subf %75, %80 : vector<8x8xf32>
    %82 = math.exp %81 : vector<8x8xf32>
    %cst_37 = arith.constant dense<0.000000e+00> : vector<8xf32>
    %83 = vector.multi_reduction <add>, %82, %cst_37 [1] : vector<8x8xf32> to vector<8xf32>
    %84 = vector.shape_cast %83 : vector<8xf32> to vector<8x1xf32>
    %85 = vector.broadcast %84 : vector<8x1xf32> to vector<8x8xf32>
    %86 = arith.divf %82, %85 : vector<8x8xf32>
    %87 = arith.truncf %86 : vector<8x8xf32> to vector<8x8xbf16>
    %88 = vector.extract_strided_slice %19 {offsets = [0, 8], sizes = [8, 8], strides = [1, 1]} : vector<8x32xbf16> to vector<8x8xbf16>
    %cst_38 = arith.constant dense<0.000000e+00> : vector<8x8xf32>
    %89 = tpu.matmul %87, %88, %cst_38 {dimension_numbers = #tpu.dot_dimension_numbers<[1], [0], [0], [1], [0, 0, 1, 1], [], []>} : vector<8x8xbf16>, vector<8x8xbf16>, vector<8x8xf32> -> vector<8x8xf32>
    %90 = vector.extract_strided_slice %50 {offsets = [0, 16], sizes = [8, 8], strides = [1, 1]} : vector<8x32xbf16> to vector<8x8xbf16>
    %91 = vector.extract_strided_slice %51 {offsets = [0, 16], sizes = [8, 8], strides = [1, 1]} : vector<8x32xbf16> to vector<8x8xbf16>
    %cst_39 = arith.constant dense<0.000000e+00> : vector<8x8xf32>
    %92 = tpu.matmul %90, %91, %cst_39 {dimension_numbers = #tpu.dot_dimension_numbers<[1], [1], [0], [0], [0, 0, 1, 0], [], []>} : vector<8x8xbf16>, vector<8x8xbf16>, vector<8x8xf32> -> vector<8x8xf32>
    %cst_40 = arith.constant -1.000000e+10 : f32
    %93 = vector.broadcast %cst_40 : f32 to vector<8x8xf32>
    %94 = arith.select %38, %92, %93 : vector<8x8xi1>, vector<8x8xf32>
    %cst_41 = arith.constant dense<0xFF800000> : vector<8xf32>
    %95 = vector.multi_reduction <maximumf>, %94, %cst_41 [1] : vector<8x8xf32> to vector<8xf32>
    %cst_42 = arith.constant 0xFF800000 : f32
    %96 = vector.broadcast %cst_42 : f32 to vector<8xf32>
    %97 = arith.maximumf %96, %95 : vector<8xf32>
    %98 = vector.shape_cast %97 : vector<8xf32> to vector<8x1xf32>
    %99 = vector.broadcast %98 : vector<8x1xf32> to vector<8x8xf32>
    %100 = arith.subf %94, %99 : vector<8x8xf32>
    %101 = math.exp %100 : vector<8x8xf32>
    %cst_43 = arith.constant dense<0.000000e+00> : vector<8xf32>
    %102 = vector.multi_reduction <add>, %101, %cst_43 [1] : vector<8x8xf32> to vector<8xf32>
    %103 = vector.shape_cast %102 : vector<8xf32> to vector<8x1xf32>
    %104 = vector.broadcast %103 : vector<8x1xf32> to vector<8x8xf32>
    %105 = arith.divf %101, %104 : vector<8x8xf32>
    %106 = arith.truncf %105 : vector<8x8xf32> to vector<8x8xbf16>
    %107 = vector.extract_strided_slice %19 {offsets = [0, 16], sizes = [8, 8], strides = [1, 1]} : vector<8x32xbf16> to vector<8x8xbf16>
    %cst_44 = arith.constant dense<0.000000e+00> : vector<8x8xf32>
    %108 = tpu.matmul %106, %107, %cst_44 {dimension_numbers = #tpu.dot_dimension_numbers<[1], [0], [0], [1], [0, 0, 1, 1], [], []>} : vector<8x8xbf16>, vector<8x8xbf16>, vector<8x8xf32> -> vector<8x8xf32>
    %109 = vector.extract_strided_slice %50 {offsets = [0, 24], sizes = [8, 8], strides = [1, 1]} : vector<8x32xbf16> to vector<8x8xbf16>
    %110 = vector.extract_strided_slice %51 {offsets = [0, 24], sizes = [8, 8], strides = [1, 1]} : vector<8x32xbf16> to vector<8x8xbf16>
    %cst_45 = arith.constant dense<0.000000e+00> : vector<8x8xf32>
    %111 = tpu.matmul %109, %110, %cst_45 {dimension_numbers = #tpu.dot_dimension_numbers<[1], [1], [0], [0], [0, 0, 1, 0], [], []>} : vector<8x8xbf16>, vector<8x8xbf16>, vector<8x8xf32> -> vector<8x8xf32>
    %cst_46 = arith.constant -1.000000e+10 : f32
    %112 = vector.broadcast %cst_46 : f32 to vector<8x8xf32>
    %113 = arith.select %38, %111, %112 : vector<8x8xi1>, vector<8x8xf32>
    %cst_47 = arith.constant dense<0xFF800000> : vector<8xf32>
    %114 = vector.multi_reduction <maximumf>, %113, %cst_47 [1] : vector<8x8xf32> to vector<8xf32>
    %cst_48 = arith.constant 0xFF800000 : f32
    %115 = vector.broadcast %cst_48 : f32 to vector<8xf32>
    %116 = arith.maximumf %115, %114 : vector<8xf32>
    %117 = vector.shape_cast %116 : vector<8xf32> to vector<8x1xf32>
    %118 = vector.broadcast %117 : vector<8x1xf32> to vector<8x8xf32>
    %119 = arith.subf %113, %118 : vector<8x8xf32>
    %120 = math.exp %119 : vector<8x8xf32>
    %cst_49 = arith.constant dense<0.000000e+00> : vector<8xf32>
    %121 = vector.multi_reduction <add>, %120, %cst_49 [1] : vector<8x8xf32> to vector<8xf32>
    %122 = vector.shape_cast %121 : vector<8xf32> to vector<8x1xf32>
    %123 = vector.broadcast %122 : vector<8x1xf32> to vector<8x8xf32>
    %124 = arith.divf %120, %123 : vector<8x8xf32>
    %125 = arith.truncf %124 : vector<8x8xf32> to vector<8x8xbf16>
    %126 = vector.extract_strided_slice %19 {offsets = [0, 24], sizes = [8, 8], strides = [1, 1]} : vector<8x32xbf16> to vector<8x8xbf16>
    %cst_50 = arith.constant dense<0.000000e+00> : vector<8x8xf32>
    %127 = tpu.matmul %125, %126, %cst_50 {dimension_numbers = #tpu.dot_dimension_numbers<[1], [0], [0], [1], [0, 0, 1, 1], [], []>} : vector<8x8xbf16>, vector<8x8xbf16>, vector<8x8xf32> -> vector<8x8xf32>
    %128 = tpu.concatenate %70, %89, %108, %127 in 1 : vector<8x8xf32>, vector<8x8xf32>, vector<8x8xf32>, vector<8x8xf32> -> vector<8x32xf32>
    %c0_51 = arith.constant 0 : index
    %c0_52 = arith.constant 0 : index
    %c0_53 = arith.constant 0 : index
    %129 = vector.load %arg11[%c0_51, %c0_52, %c0_53] : memref<1x1x32xf32, #tpu.memory_space<vmem>>, vector<1x1x32xf32>
    %130 = vector.shape_cast %129 : vector<1x1x32xf32> to vector<32xf32>
    %131 = vector.shape_cast %130 : vector<32xf32> to vector<1x32xf32>
    %132 = vector.broadcast %131 : vector<1x32xf32> to vector<8x32xf32>
    %133 = arith.mulf %132, %18 : vector<8x32xf32>
    %134 = arith.addf %128, %133 : vector<8x32xf32>
    %c0_54 = arith.constant 0 : index
    %c0_55 = arith.constant 0 : index
    %c0_56 = arith.constant 0 : index
    %135 = vector.load %arg12[%c0_54, %c0_55, %c0_56] : memref<1x1x32xf32, #tpu.memory_space<vmem>>, vector<1x1x32xf32>
    %136 = vector.shape_cast %135 : vector<1x1x32xf32> to vector<32xf32>
    %137 = vector.shape_cast %136 : vector<32xf32> to vector<1x32xf32>
    %138 = vector.broadcast %137 : vector<1x32xf32> to vector<8x32xf32>
    %139 = arith.mulf %138, %47 : vector<8x32xf32>
    %140 = arith.subf %134, %139 : vector<8x32xf32>
    %141 = arith.index_cast %arg1 : i32 to index
    %142 = memref.load %arg13[%141] : memref<2xf32, #tpu.memory_space<smem>>
    %143 = vector.broadcast %142 : f32 to vector<8x32xf32>
    %144 = arith.mulf %140, %143 : vector<8x32xf32>
    %c0_57 = arith.constant 0 : index
    %c0_58 = arith.constant 0 : index
    %c0_59 = arith.constant 0 : index
    %145 = vector.load %arg4[%c0_57, %c0_58, %c0_59] : memref<1x1x32xf32, #tpu.memory_space<vmem>>, vector<1x1x32xf32>
    %146 = vector.shape_cast %145 : vector<1x1x32xf32> to vector<32xf32>
    %147 = arith.mulf %3, %3 : vector<8x32xf32>
    %cst_60 = arith.constant dense<0.000000e+00> : vector<8xf32>
    %148 = vector.multi_reduction <add>, %147, %cst_60 [1] : vector<8x32xf32> to vector<8xf32>
    %149 = vector.shape_cast %148 : vector<8xf32> to vector<8x1xf32>
    %cst_61 = arith.constant 3.200000e+01 : f32
    %150 = vector.broadcast %cst_61 : f32 to vector<8x1xf32>
    %151 = arith.divf %149, %150 : vector<8x1xf32>
    %cst_62 = arith.constant 9.99999974E-6 : f32
    %152 = vector.broadcast %cst_62 : f32 to vector<8x1xf32>
    %153 = arith.addf %151, %152 : vector<8x1xf32>
    %154 = math.rsqrt %153 : vector<8x1xf32>
    %155 = vector.broadcast %154 : vector<8x1xf32> to vector<8x32xf32>
    %156 = arith.mulf %3, %155 : vector<8x32xf32>
    %157 = vector.shape_cast %146 : vector<32xf32> to vector<1x32xf32>
    %158 = vector.broadcast %157 : vector<1x32xf32> to vector<8x32xf32>
    %159 = arith.mulf %156, %158 : vector<8x32xf32>
    %160 = arith.truncf %159 : vector<8x32xf32> to vector<8x32xbf16>
    %c0_63 = arith.constant 0 : index
    %c0_64 = arith.constant 0 : index
    %c0_65 = arith.constant 0 : index
    %161 = vector.load %arg7[%c0_63, %c0_64, %c0_65] : memref<1x32x128xbf16, #tpu.memory_space<vmem>>, vector<1x32x128xbf16>
    %162 = vector.shape_cast %161 : vector<1x32x128xbf16> to vector<32x128xbf16>
    %cst_66 = arith.constant dense<0.000000e+00> : vector<8x128xf32>
    %163 = tpu.matmul %160, %162, %cst_66 {dimension_numbers = #tpu.dot_dimension_numbers<[1], [0], [0], [1], [0, 0, 1, 1], [], []>} : vector<8x32xbf16>, vector<32x128xbf16>, vector<8x128xf32> -> vector<8x128xf32>
    %c0_67 = arith.constant 0 : index
    %c0_68 = arith.constant 0 : index
    %c0_69 = arith.constant 0 : index
    %164 = vector.load %arg8[%c0_67, %c0_68, %c0_69] : memref<1x1x128xf32, #tpu.memory_space<vmem>>, vector<1x1x128xf32>
    %165 = vector.shape_cast %164 : vector<1x1x128xf32> to vector<128xf32>
    %166 = vector.shape_cast %165 : vector<128xf32> to vector<1x128xf32>
    %167 = vector.broadcast %166 : vector<1x128xf32> to vector<8x128xf32>
    %168 = arith.addf %163, %167 : vector<8x128xf32>
    %cst_70 = arith.constant 0.000000e+00 : f32
    %169 = vector.broadcast %cst_70 : f32 to vector<8x128xf32>
    %170 = arith.maximumf %168, %169 : vector<8x128xf32>
    %171 = arith.truncf %170 : vector<8x128xf32> to vector<8x128xbf16>
    %c0_71 = arith.constant 0 : index
    %c0_72 = arith.constant 0 : index
    %c0_73 = arith.constant 0 : index
    %172 = vector.load %arg9[%c0_71, %c0_72, %c0_73] : memref<1x128x32xbf16, #tpu.memory_space<vmem>>, vector<1x128x32xbf16>
    %173 = vector.shape_cast %172 : vector<1x128x32xbf16> to vector<128x32xbf16>
    %cst_74 = arith.constant dense<0.000000e+00> : vector<8x32xf32>
    %174 = tpu.matmul %171, %173, %cst_74 {dimension_numbers = #tpu.dot_dimension_numbers<[1], [0], [0], [1], [0, 0, 1, 1], [], []>} : vector<8x128xbf16>, vector<128x32xbf16>, vector<8x32xf32> -> vector<8x32xf32>
    %c0_75 = arith.constant 0 : index
    %c0_76 = arith.constant 0 : index
    %c0_77 = arith.constant 0 : index
    %175 = vector.load %arg10[%c0_75, %c0_76, %c0_77] : memref<1x1x32xf32, #tpu.memory_space<vmem>>, vector<1x1x32xf32>
    %176 = vector.shape_cast %175 : vector<1x1x32xf32> to vector<32xf32>
    %177 = vector.shape_cast %176 : vector<32xf32> to vector<1x32xf32>
    %178 = vector.broadcast %177 : vector<1x32xf32> to vector<8x32xf32>
    %179 = arith.addf %174, %178 : vector<8x32xf32>
    %180 = arith.addf %144, %179 : vector<8x32xf32>
    %c0_78 = arith.constant 0 : index
    %c0_79 = arith.constant 0 : index
    %181 = vector.load %arg17[%c0_78, %c0_79] : memref<8x32xf32, #tpu.memory_space<vmem>>, vector<8x32xf32>
    tpu.vector_store %arg17[%c0_78, %c0_79], %180 {strides = array<i32>} : memref<8x32xf32, #tpu.memory_space<vmem>>, vector<8x32xf32>,
    %c1_i32 = arith.constant 1 : i32
    %182 = arith.cmpi eq, %arg1, %c1_i32 : i32
    %183 = arith.extui %182 : i1 to i32
    %c0_i32_80 = arith.constant 0 : i32
    %184 = arith.cmpi ne, %183, %c0_i32_80 : i32
    scf.if %184 {
      %c0_81 = arith.constant 0 : index
      %c0_82 = arith.constant 0 : index
      %c0_83 = arith.constant 0 : index
      %185 = vector.load %arg14[%c0_81, %c0_82, %c0_83] : memref<1x8x32xf32, #tpu.memory_space<vmem>>, vector<1x8x32xf32>
      %186 = vector.shape_cast %185 : vector<1x8x32xf32> to vector<8x32xf32>
      %187 = vector.shape_cast %180 : vector<8x32xf32> to vector<1x8x32xf32>
      tpu.vector_store %arg14[%c0_81, %c0_82, %c0_83], %187 {strides = array<i32>} : memref<1x8x32xf32, #tpu.memory_space<vmem>>, vector<1x8x32xf32>,
    } else {
    }
    return
  }
  func.func @transform_0(%arg0: i32, %arg1: i32) -> (i32, i32, i32) {
    %c0_i32 = arith.constant 0 : i32
    %c0_i32_0 = arith.constant 0 : i32
    %c0_i32_1 = arith.constant 0 : i32
    return %arg0, %c0_i32, %c0_i32_0 : i32, i32, i32
  }
  func.func @transform_1(%arg0: i32, %arg1: i32) -> (i32, i32, i32) {
    %c0_i32 = arith.constant 0 : i32
    %c0_i32_0 = arith.constant 0 : i32
    %c0_i32_1 = arith.constant 0 : i32
    return %arg1, %c0_i32, %c0_i32_0 : i32, i32, i32
  }
  func.func @transform_2(%arg0: i32, %arg1: i32) -> (i32, i32, i32) {
    %c0_i32 = arith.constant 0 : i32
    %c0_i32_0 = arith.constant 0 : i32
    %c0_i32_1 = arith.constant 0 : i32
    return %arg1, %c0_i32, %c0_i32_0 : i32, i32, i32
  }
  func.func @transform_3(%arg0: i32, %arg1: i32) -> (i32, i32, i32) {
    %c0_i32 = arith.constant 0 : i32
    %c0_i32_0 = arith.constant 0 : i32
    %c0_i32_1 = arith.constant 0 : i32
    return %arg1, %c0_i32, %c0_i32_0 : i32, i32, i32
  }
  func.func @transform_4(%arg0: i32, %arg1: i32) -> (i32, i32, i32) {
    %c0_i32 = arith.constant 0 : i32
    %c0_i32_0 = arith.constant 0 : i32
    %c0_i32_1 = arith.constant 0 : i32
    return %arg1, %c0_i32, %c0_i32_0 : i32, i32, i32
  }
  func.func @transform_5(%arg0: i32, %arg1: i32) -> (i32, i32, i32) {
    %c0_i32 = arith.constant 0 : i32
    %c0_i32_0 = arith.constant 0 : i32
    %c0_i32_1 = arith.constant 0 : i32
    return %arg1, %c0_i32, %c0_i32_0 : i32, i32, i32
  }
  func.func @transform_6(%arg0: i32, %arg1: i32) -> (i32, i32, i32) {
    %c0_i32 = arith.constant 0 : i32
    %c0_i32_0 = arith.constant 0 : i32
    %c0_i32_1 = arith.constant 0 : i32
    return %arg1, %c0_i32, %c0_i32_0 : i32, i32, i32
  }
  func.func @transform_7(%arg0: i32, %arg1: i32) -> (i32, i32, i32) {
    %c0_i32 = arith.constant 0 : i32
    %c0_i32_0 = arith.constant 0 : i32
    %c0_i32_1 = arith.constant 0 : i32
    return %arg1, %c0_i32, %c0_i32_0 : i32, i32, i32
  }
  func.func @transform_8(%arg0: i32, %arg1: i32) -> (i32, i32, i32) {
    %c0_i32 = arith.constant 0 : i32
    %c0_i32_0 = arith.constant 0 : i32
    %c0_i32_1 = arith.constant 0 : i32
    return %arg1, %c0_i32, %c0_i32_0 : i32, i32, i32
  }
  func.func @transform_9(%arg0: i32, %arg1: i32) -> (i32, i32, i32) {
    %c0_i32 = arith.constant 0 : i32
    %c0_i32_0 = arith.constant 0 : i32
    %c0_i32_1 = arith.constant 0 : i32
    return %arg1, %c0_i32, %c0_i32_0 : i32, i32, i32
  }
  func.func @transform_10(%arg0: i32, %arg1: i32) -> (i32, i32, i32) {
    %c0_i32 = arith.constant 0 : i32
    %c0_i32_0 = arith.constant 0 : i32
    %c0_i32_1 = arith.constant 0 : i32
    return %arg1, %c0_i32, %c0_i32_0 : i32, i32, i32
  }
  func.func @transform_11(%arg0: i32, %arg1: i32) -> i32 {
    %c0_i32 = arith.constant 0 : i32
    %c0_i32_0 = arith.constant 0 : i32
    return %c0_i32 : i32
  }
  func.func @transform_12(%arg0: i32, %arg1: i32) -> (i32, i32, i32) {
    %c0_i32 = arith.constant 0 : i32
    %c0_i32_0 = arith.constant 0 : i32
    %c0_i32_1 = arith.constant 0 : i32
    return %arg0, %c0_i32, %c0_i32_0 : i32, i32, i32
  }
  func.func @transform_13(%arg0: i32, %arg1: i32) -> (i32, i32, i32, i32) {
    %c0_i32 = arith.constant 0 : i32
    %c0_i32_0 = arith.constant 0 : i32
    %c0_i32_1 = arith.constant 0 : i32
    return %arg1, %arg0, %c0_i32, %c0_i32_0 : i32, i32, i32, i32
  }
  func.func @transform_14(%arg0: i32, %arg1: i32) -> (i32, i32, i32, i32) {
    %c0_i32 = arith.constant 0 : i32
    %c0_i32_0 = arith.constant 0 : i32
    %c0_i32_1 = arith.constant 0 : i32
    return %arg1, %arg0, %c0_i32, %c0_i32_0 : i32, i32, i32, i32
  }
}

</mosaic_0001>

<llo_original>
// kernel: tpu_custom_call.1
$region0: #{tpu_custom_call.1}
  #allocation0 [shape = 'u32[]', space=smem, size = 0x4, offset = 0x4, fixed_abs, tag = 'smem constant byte address 0x4 - core index']
  #allocation1 [shape = 'u32[72,128]{1,0:T(1,128)}', space=vmem, size = 0x9000, scoped, tag = 'internal scratch']
  #allocation2 [shape = 'f32[8,32]{1,0:T(8,128)}', space=vmem, size = 0x1000, scoped, tag = 'scratch operand']
  %s0 = inlined_call_operand.vmem [shape: f32[2,8,32], index: 0, kind: input, shape index: {}]
  %s1 = inlined_call_operand.vmem [shape: f32[2,1,32], index: 1, kind: input, shape index: {}]
  %s2 = inlined_call_operand.vmem [shape: f32[2,1,32], index: 2, kind: input, shape index: {}]
  %s3 = inlined_call_operand.vmem [shape: bf16[2,32,64], index: 3, kind: input, shape index: {}]
  %s4 = inlined_call_operand.vmem [shape: f32[2,1,64], index: 4, kind: input, shape index: {}]
  %s5 = inlined_call_operand.vmem [shape: bf16[2,32,128], index: 5, kind: input, shape index: {}]
  %s6 = inlined_call_operand.vmem [shape: f32[2,1,128], index: 6, kind: input, shape index: {}]
  %s7 = inlined_call_operand.vmem [shape: bf16[2,128,32], index: 7, kind: input, shape index: {}]
  %s8 = inlined_call_operand.vmem [shape: f32[2,1,32], index: 8, kind: input, shape index: {}]
  %s9 = inlined_call_operand.vmem [shape: f32[2,1,32], index: 9, kind: input, shape index: {}]
  %s10 = inlined_call_operand.vmem [shape: f32[2,1,32], index: 10, kind: input, shape index: {}]
  %s11 = inlined_call_operand.vmem [shape: f32[2], index: 11, kind: input, shape index: {}]
  %s12 = inlined_call_operand.hbm [shape: f32[2,8,32], index: 12, kind: output, shape index: {0}]
  %s13 = inlined_call_operand.hbm [shape: f32[2,2,8,32], index: 13, kind: output, shape index: {1}]
  %s14 = inlined_call_operand.hbm [shape: f32[2,2,8,32], index: 14, kind: output, shape index: {2}]
  %15 = xla_tuple %s12, %s13, %s14
  %s16 = sld [smem:[#allocation0]]
  $region109: #{tpu_custom_call.1} parent=0
    _
  %s18 = ssub.s32 1, %s16
  %s19 = scalar_select 0, %s18, %s16
  $region1: #{tpu_custom_call.1} parent=0
    #allocation3 [shape = 'u8[512]{0}', space=smem, size = 0x200, scoped, tag = 'input window, operand 11, single buffered']
    #allocation4 [shape = 's32[2]{0}', space=sflag, size = 0x8, scoped, tag = 'scoped memory for tpu_custom_call.1']
    #allocation5 [shape = 's32[2]{0}', space=sflag, size = 0x8, scoped, tag = 'scoped memory for tpu_custom_call.1']
    #allocation6 [shape = 'u8[8192]{0}', space=vmem, size = 0x2000, scoped, tag = 'output window, operand 0']
    #allocation7 [shape = 'u8[8192]{0}', space=vmem, size = 0x2000, scoped, tag = 'output window, operand 1']
    #allocation8 [shape = 's32[2]{0}', space=sflag, size = 0x8, scoped, tag = 'scoped memory for tpu_custom_call.1']
    #allocation9 [shape = 'u8[8192]{0}', space=vmem, size = 0x2000, scoped, tag = 'output window, operand 2']
    %20 = vsyncpa [#allocation5], 0
    %21 = vsyncpa [#allocation4], 0
    %s22 = scalar_lea.sflag [#allocation4], 1
    %23 = vsyncpa %s22, 0
    %24 = vsyncpa [#allocation8], 0
    %s25 = scalar_lea.sflag [#allocation8], 1
    %26 = vsyncpa %s25, 0
    loop: start=0, step=1, limit=6
    $region2: #{tpu_custom_call.1} parent=1 // loop_pre_header
      _
    $region3: #{tpu_custom_call.1} parent=1 // loop_header
      %s28 = sphi 0, %s32
      %p29 = scmp.ge.s32.totalorder %s28, 6
      %s35 = sphi 0, %s47
      %s36 = sphi 0, %s43
      %s37 = sphi 0, %s35
      %s38 = sphi 0, %s36
      %s39 = sphi 0, %s37
      %s40 = sphi 0, %s38
      %s50 = sphi 0, %s52
      %s53 = sphi 0, %s50
      %s54 = sphi 0, %s53
      %s70 = sphi 0, %s54
      %s76 = sphi 0, %s78
      %s79 = sphi 0, %s76
      %s80 = sphi 0, %s79
      %s96 = sphi 0, %s80
      %s102 = sphi 0, %s104
      %s105 = sphi 0, %s102
      %s106 = sphi 0, %s105
      %s122 = sphi 0, %s106
      %s128 = sphi 0, %s130
      %s131 = sphi 0, %s128
      %s132 = sphi 0, %s131
      %s148 = sphi 0, %s132
      %s154 = sphi 0, %s156
      %s157 = sphi 0, %s154
      %s158 = sphi 0, %s157
      %s174 = sphi 0, %s158
      %s180 = sphi 0, %s182
      %s183 = sphi 0, %s180
      %s184 = sphi 0, %s183
      %s200 = sphi 0, %s184
      %s206 = sphi 0, %s208
      %s209 = sphi 0, %s206
      %s210 = sphi 0, %s209
      %s226 = sphi 0, %s210
      %s232 = sphi 0, %s234
      %s235 = sphi 0, %s232
      %s236 = sphi 0, %s235
      %s252 = sphi 0, %s236
      %s258 = sphi 0, %s260
      %s261 = sphi 0, %s258
      %s262 = sphi 0, %s261
      %s278 = sphi 0, %s262
      %s284 = sphi 0, %s286
      %s287 = sphi 0, %s284
      %s288 = sphi 0, %s287
      %s304 = sphi 0, %s288
      %s310 = sphi 0, %s312
      %s313 = sphi 0, %s310
      %s314 = sphi 0, %s313
      %s330 = sphi 0, %s314
      %s334 = sphi 0, %s334
      %s336 = sphi 0, %s334
      %s337 = sphi 0, %s336
      %s351 = sphi 0, %s337
      %s357 = sphi 0, %s359
      %s360 = sphi 0, %s357
      %s361 = sphi 0, %s360
      %s377 = sphi 0, %s361
      %s385 = sphi 0, %s387
      %s388 = sphi 0, %s385
      %s389 = sphi 0, %s388
      %s405 = sphi 0, %s389
      %s413 = sphi 0, %s415
      %s416 = sphi 0, %s413
      %s417 = sphi 0, %s416
      %s433 = sphi 0, %s417
    $region4: #{tpu_custom_call.1} parent=1 // loop_header_branch
      %31 = sbr.rel (%p29) target = $region8
    $region5: #{tpu_custom_call.1} parent=1 // loop_body
      %s33 = ssub.s32 %s28, 1
      %s34 = ssub.s32 %s28, 2
      %s41 = sadd.s32 1, %s36
      %p42 = scmp.ge.s32.totalorder %s41, 2
      %s43 = scalar_select %p42, 0, %s41
      %s44 = sadd.s32 1, %s35
      %s45 = scalar_select %p42, %s44, %s35
      %p46 = scmp.ge.s32.totalorder %s45, 2
      %s47 = scalar_select %p46, 0, %s45
      %s48 = ssub.s32 %s35, %s47
      %p49 = scmp.eq.s32.totalorder %s48, 0
      %s51 = sadd.s32 %s50, 1
      %s52 = scalar_select %p49, %s50, %s51
      %p55 = pneg %p49
      %p56 = scmp.eq.s32.totalorder %s28, 3
      %p57 = por %p55, %p56
      %p58 = scmp.ne.s32.totalorder %s50, %s53
      %p59 = scmp.eq.s32.totalorder %s28, 0
      %p60 = por %p58, %p59
      %p61 = scmp.ne.s32.totalorder %s50, %s53
      %p62 = scmp.eq.s32.totalorder %s33, 3
      %p63 = por %p61, %p62
      %p64 = scmp.ne.s32.totalorder %s53, %s54
      %p65 = scmp.eq.s32.totalorder %s33, 0
      %p66 = por %p64, %p65
      %p67 = scmp.ne.s32.totalorder %s53, %s54
      %p68 = scmp.eq.s32.totalorder %s34, 3
      %p69 = por %p67, %p68
      %p71 = scmp.ne.s32.totalorder %s54, %s70
      %p72 = scmp.eq.s32.totalorder %s34, 0
      %p73 = por %p71, %p72
      %s74 = ssub.s32 %s36, %s43
      %p75 = scmp.eq.s32.totalorder %s74, 0
      %s77 = sadd.s32 %s76, 1
      %s78 = scalar_select %p75, %s76, %s77
      %p81 = pneg %p75
      %p82 = scmp.eq.s32.totalorder %s28, 3
      %p83 = por %p81, %p82
      %p84 = scmp.ne.s32.totalorder %s76, %s79
      %p85 = scmp.eq.s32.totalorder %s28, 0
      %p86 = por %p84, %p85
      %p87 = scmp.ne.s32.totalorder %s76, %s79
      %p88 = scmp.eq.s32.totalorder %s33, 3
      %p89 = por %p87, %p88
      %p90 = scmp.ne.s32.totalorder %s79, %s80
      %p91 = scmp.eq.s32.totalorder %s33, 0
      %p92 = por %p90, %p91
      %p93 = scmp.ne.s32.totalorder %s79, %s80
      %p94 = scmp.eq.s32.totalorder %s34, 3
      %p95 = por %p93, %p94
      %p97 = scmp.ne.s32.totalorder %s80, %s96
      %p98 = scmp.eq.s32.totalorder %s34, 0
      %p99 = por %p97, %p98
      %s100 = ssub.s32 %s36, %s43
      %p101 = scmp.eq.s32.totalorder %s100, 0
      %s103 = sadd.s32 %s102, 1
      %s104 = scalar_select %p101, %s102, %s103
      %p107 = pneg %p101
      %p108 = scmp.eq.s32.totalorder %s28, 3
      %p109 = por %p107, %p108
      %p110 = scmp.ne.s32.totalorder %s102, %s105
      %p111 = scmp.eq.s32.totalorder %s28, 0
      %p112 = por %p110, %p111
      %p113 = scmp.ne.s32.totalorder %s102, %s105
      %p114 = scmp.eq.s32.totalorder %s33, 3
      %p115 = por %p113, %p114
      %p116 = scmp.ne.s32.totalorder %s105, %s106
      %p117 = scmp.eq.s32.totalorder %s33, 0
      %p118 = por %p116, %p117
      %p119 = scmp.ne.s32.totalorder %s105, %s106
      %p120 = scmp.eq.s32.totalorder %s34, 3
      %p121 = por %p119, %p120
      %p123 = scmp.ne.s32.totalorder %s106, %s122
      %p124 = scmp.eq.s32.totalorder %s34, 0
      %p125 = por %p123, %p124
      %s126 = ssub.s32 %s36, %s43
      %p127 = scmp.eq.s32.totalorder %s126, 0
      %s129 = sadd.s32 %s128, 1
      %s130 = scalar_select %p127, %s128, %s129
      %p133 = pneg %p127
      %p134 = scmp.eq.s32.totalorder %s28, 3
      %p135 = por %p133, %p134
      %p136 = scmp.ne.s32.totalorder %s128, %s131
      %p137 = scmp.eq.s32.totalorder %s28, 0
      %p138 = por %p136, %p137
      %p139 = scmp.ne.s32.totalorder %s128, %s131
      %p140 = scmp.eq.s32.totalorder %s33, 3
      %p141 = por %p139, %p140
      %p142 = scmp.ne.s32.totalorder %s131, %s132
      %p143 = scmp.eq.s32.totalorder %s33, 0
      %p144 = por %p142, %p143
      %p145 = scmp.ne.s32.totalorder %s131, %s132
      %p146 = scmp.eq.s32.totalorder %s34, 3
      %p147 = por %p145, %p146
      %p149 = scmp.ne.s32.totalorder %s132, %s148
      %p150 = scmp.eq.s32.totalorder %s34, 0
      %p151 = por %p149, %p150
      %s152 = ssub.s32 %s36, %s43
      %p153 = scmp.eq.s32.totalorder %s152, 0
      %s155 = sadd.s32 %s154, 1
      %s156 = scalar_select %p153, %s154, %s155
      %p159 = pneg %p153
      %p160 = scmp.eq.s32.totalorder %s28, 3
      %p161 = por %p159, %p160
      %p162 = scmp.ne.s32.totalorder %s154, %s157
      %p163 = scmp.eq.s32.totalorder %s28, 0
      %p164 = por %p162, %p163
      %p165 = scmp.ne.s32.totalorder %s154, %s157
      %p166 = scmp.eq.s32.totalorder %s33, 3
      %p167 = por %p165, %p166
      %p168 = scmp.ne.s32.totalorder %s157, %s158
      %p169 = scmp.eq.s32.totalorder %s33, 0
      %p170 = por %p168, %p169
      %p171 = scmp.ne.s32.totalorder %s157, %s158
      %p172 = scmp.eq.s32.totalorder %s34, 3
      %p173 = por %p171, %p172
      %p175 = scmp.ne.s32.totalorder %s158, %s174
      %p176 = scmp.eq.s32.totalorder %s34, 0
      %p177 = por %p175, %p176
      %s178 = ssub.s32 %s36, %s43
      %p179 = scmp.eq.s32.totalorder %s178, 0
      %s181 = sadd.s32 %s180, 1
      %s182 = scalar_select %p179, %s180, %s181
      %p185 = pneg %p179
      %p186 = scmp.eq.s32.totalorder %s28, 3
      %p187 = por %p185, %p186
      %p188 = scmp.ne.s32.totalorder %s180, %s183
      %p189 = scmp.eq.s32.totalorder %s28, 0
      %p190 = por %p188, %p189
      %p191 = scmp.ne.s32.totalorder %s180, %s183
      %p192 = scmp.eq.s32.totalorder %s33, 3
      %p193 = por %p191, %p192
      %p194 = scmp.ne.s32.totalorder %s183, %s184
      %p195 = scmp.eq.s32.totalorder %s33, 0
      %p196 = por %p194, %p195
      %p197 = scmp.ne.s32.totalorder %s183, %s184
      %p198 = scmp.eq.s32.totalorder %s34, 3
      %p199 = por %p197, %p198
      %p201 = scmp.ne.s32.totalorder %s184, %s200
      %p202 = scmp.eq.s32.totalorder %s34, 0
      %p203 = por %p201, %p202
      %s204 = ssub.s32 %s36, %s43
      %p205 = scmp.eq.s32.totalorder %s204, 0
      %s207 = sadd.s32 %s206, 1
      %s208 = scalar_select %p205, %s206, %s207
      %p211 = pneg %p205
      %p212 = scmp.eq.s32.totalorder %s28, 3
      %p213 = por %p211, %p212
      %p214 = scmp.ne.s32.totalorder %s206, %s209
      %p215 = scmp.eq.s32.totalorder %s28, 0
      %p216 = por %p214, %p215
      %p217 = scmp.ne.s32.totalorder %s206, %s209
      %p218 = scmp.eq.s32.totalorder %s33, 3
      %p219 = por %p217, %p218
      %p220 = scmp.ne.s32.totalorder %s209, %s210
      %p221 = scmp.eq.s32.totalorder %s33, 0
      %p222 = por %p220, %p221
      %p223 = scmp.ne.s32.totalorder %s209, %s210
      %p224 = scmp.eq.s32.totalorder %s34, 3
      %p225 = por %p223, %p224
      %p227 = scmp.ne.s32.totalorder %s210, %s226
      %p228 = scmp.eq.s32.totalorder %s34, 0
      %p229 = por %p227, %p228
      %s230 = ssub.s32 %s36, %s43
      %p231 = scmp.eq.s32.totalorder %s230, 0
      %s233 = sadd.s32 %s232, 1
      %s234 = scalar_select %p231, %s232, %s233
      %p237 = pneg %p231
      %p238 = scmp.eq.s32.totalorder %s28, 3
      %p239 = por %p237, %p238
      %p240 = scmp.ne.s32.totalorder %s232, %s235
      %p241 = scmp.eq.s32.totalorder %s28, 0
      %p242 = por %p240, %p241
      %p243 = scmp.ne.s32.totalorder %s232, %s235
      %p244 = scmp.eq.s32.totalorder %s33, 3
      %p245 = por %p243, %p244
      %p246 = scmp.ne.s32.totalorder %s235, %s236
      %p247 = scmp.eq.s32.totalorder %s33, 0
      %p248 = por %p246, %p247
      %p249 = scmp.ne.s32.totalorder %s235, %s236
      %p250 = scmp.eq.s32.totalorder %s34, 3
      %p251 = por %p249, %p250
      %p253 = scmp.ne.s32.totalorder %s236, %s252
      %p254 = scmp.eq.s32.totalorder %s34, 0
      %p255 = por %p253, %p254
      %s256 = ssub.s32 %s36, %s43
      %p257 = scmp.eq.s32.totalorder %s256, 0
      %s259 = sadd.s32 %s258, 1
      %s260 = scalar_select %p257, %s258, %s259
      %p263 = pneg %p257
      %p264 = scmp.eq.s32.totalorder %s28, 3
      %p265 = por %p263, %p264
      %p266 = scmp.ne.s32.totalorder %s258, %s261
      %p267 = scmp.eq.s32.totalorder %s28, 0
      %p268 = por %p266, %p267
      %p269 = scmp.ne.s32.totalorder %s258, %s261
      %p270 = scmp.eq.s32.totalorder %s33, 3
      %p271 = por %p269, %p270
      %p272 = scmp.ne.s32.totalorder %s261, %s262
      %p273 = scmp.eq.s32.totalorder %s33, 0
      %p274 = por %p272, %p273
      %p275 = scmp.ne.s32.totalorder %s261, %s262
      %p276 = scmp.eq.s32.totalorder %s34, 3
      %p277 = por %p275, %p276
      %p279 = scmp.ne.s32.totalorder %s262, %s278
      %p280 = scmp.eq.s32.totalorder %s34, 0
      %p281 = por %p279, %p280
      %s282 = ssub.s32 %s36, %s43
      %p283 = scmp.eq.s32.totalorder %s282, 0
      %s285 = sadd.s32 %s284, 1
      %s286 = scalar_select %p283, %s284, %s285
      %p289 = pneg %p283
      %p290 = scmp.eq.s32.totalorder %s28, 3
      %p291 = por %p289, %p290
      %p292 = scmp.ne.s32.totalorder %s284, %s287
      %p293 = scmp.eq.s32.totalorder %s28, 0
      %p294 = por %p292, %p293
      %p295 = scmp.ne.s32.totalorder %s284, %s287
      %p296 = scmp.eq.s32.totalorder %s33, 3
      %p297 = por %p295, %p296
      %p298 = scmp.ne.s32.totalorder %s287, %s288
      %p299 = scmp.eq.s32.totalorder %s33, 0
      %p300 = por %p298, %p299
      %p301 = scmp.ne.s32.totalorder %s287, %s288
      %p302 = scmp.eq.s32.totalorder %s34, 3
      %p303 = por %p301, %p302
      %p305 = scmp.ne.s32.totalorder %s288, %s304
      %p306 = scmp.eq.s32.totalorder %s34, 0
      %p307 = por %p305, %p306
      %s308 = ssub.s32 %s36, %s43
      %p309 = scmp.eq.s32.totalorder %s308, 0
      %s311 = sadd.s32 %s310, 1
      %s312 = scalar_select %p309, %s310, %s311
      %p315 = pneg %p309
      %p316 = scmp.eq.s32.totalorder %s28, 3
      %p317 = por %p315, %p316
      %p318 = scmp.ne.s32.totalorder %s310, %s313
      %p319 = scmp.eq.s32.totalorder %s28, 0
      %p320 = por %p318, %p319
      %p321 = scmp.ne.s32.totalorder %s310, %s313
      %p322 = scmp.eq.s32.totalorder %s33, 3
      %p323 = por %p321, %p322
      %p324 = scmp.ne.s32.totalorder %s313, %s314
      %p325 = scmp.eq.s32.totalorder %s33, 0
      %p326 = por %p324, %p325
      %p327 = scmp.ne.s32.totalorder %s313, %s314
      %p328 = scmp.eq.s32.totalorder %s34, 3
      %p329 = por %p327, %p328
      %p331 = scmp.ne.s32.totalorder %s314, %s330
      %p332 = scmp.eq.s32.totalorder %s34, 0
      %p333 = por %p331, %p332
      %s335 = sadd.s32 %s334, 1
      %p338 = scmp.eq.s32.totalorder %s28, 3
      %p339 = scmp.ne.s32.totalorder %s334, %s336
      %p340 = scmp.eq.s32.totalorder %s28, 0
      %p341 = por %p339, %p340
      %p342 = scmp.ne.s32.totalorder %s334, %s336
      %p343 = scmp.eq.s32.totalorder %s33, 3
      %p344 = por %p342, %p343
      %p345 = scmp.ne.s32.totalorder %s336, %s337
      %p346 = scmp.eq.s32.totalorder %s33, 0
      %p347 = por %p345, %p346
      %p348 = scmp.ne.s32.totalorder %s336, %s337
      %p349 = scmp.eq.s32.totalorder %s34, 3
      %p350 = por %p348, %p349
      %p352 = scmp.ne.s32.totalorder %s337, %s351
      %p353 = scmp.eq.s32.totalorder %s34, 0
      %p354 = por %p352, %p353
      %s355 = ssub.s32 %s35, %s47
      %p356 = scmp.eq.s32.totalorder %s355, 0
      %s358 = sadd.s32 %s357, 1
      %s359 = scalar_select %p356, %s357, %s358
      %p362 = pneg %p356
      %p363 = scmp.eq.s32.totalorder %s28, 3
      %p364 = por %p362, %p363
      %p365 = scmp.ne.s32.totalorder %s357, %s360
      %p366 = scmp.eq.s32.totalorder %s28, 0
      %p367 = por %p365, %p366
      %p368 = scmp.ne.s32.totalorder %s357, %s360
      %p369 = scmp.eq.s32.totalorder %s33, 3
      %p370 = por %p368, %p369
      %p371 = scmp.ne.s32.totalorder %s360, %s361
      %p372 = scmp.eq.s32.totalorder %s33, 0
      %p373 = por %p371, %p372
      %p374 = scmp.ne.s32.totalorder %s360, %s361
      %p375 = scmp.eq.s32.totalorder %s34, 3
      %p376 = por %p374, %p375
      %p378 = scmp.ne.s32.totalorder %s361, %s377
      %p379 = scmp.eq.s32.totalorder %s34, 0
      %p380 = por %p378, %p379
      %s381 = ssub.s32 %s36, %s43
      %s382 = ssub.s32 %s35, %s47
      %s383 = sor.u32 %s381, %s382
      %p384 = scmp.eq.s32.totalorder %s383, 0
      %s386 = sadd.s32 %s385, 1
      %s387 = scalar_select %p384, %s385, %s386
      %p390 = pneg %p384
      %p391 = scmp.eq.s32.totalorder %s28, 3
      %p392 = por %p390, %p391
      %p393 = scmp.ne.s32.totalorder %s385, %s388
      %p394 = scmp.eq.s32.totalorder %s28, 0
      %p395 = por %p393, %p394
      %p396 = scmp.ne.s32.totalorder %s385, %s388
      %p397 = scmp.eq.s32.totalorder %s33, 3
      %p398 = por %p396, %p397
      %p399 = scmp.ne.s32.totalorder %s388, %s389
      %p400 = scmp.eq.s32.totalorder %s33, 0
      %p401 = por %p399, %p400
      %p402 = scmp.ne.s32.totalorder %s388, %s389
      %p403 = scmp.eq.s32.totalorder %s34, 3
      %p404 = por %p402, %p403
      %p406 = scmp.ne.s32.totalorder %s389, %s405
      %p407 = scmp.eq.s32.totalorder %s34, 0
      %p408 = por %p406, %p407
      %s409 = ssub.s32 %s36, %s43
      %s410 = ssub.s32 %s35, %s47
      %s411 = sor.u32 %s409, %s410
      %p412 = scmp.eq.s32.totalorder %s411, 0
      %s414 = sadd.s32 %s413, 1
      %s415 = scalar_select %p412, %s413, %s414
      %p418 = pneg %p412
      %p419 = scmp.eq.s32.totalorder %s28, 3
      %p420 = por %p418, %p419
      %p421 = scmp.ne.s32.totalorder %s413, %s416
      %p422 = scmp.eq.s32.totalorder %s28, 0
      %p423 = por %p421, %p422
      %p424 = scmp.ne.s32.totalorder %s413, %s416
      %p425 = scmp.eq.s32.totalorder %s33, 3
      %p426 = por %p424, %p425
      %p427 = scmp.ne.s32.totalorder %s416, %s417
      %p428 = scmp.eq.s32.totalorder %s33, 0
      %p429 = por %p427, %p428
      %p430 = scmp.ne.s32.totalorder %s416, %s417
      %p431 = scmp.eq.s32.totalorder %s34, 3
      %p432 = por %p430, %p431
      %p434 = scmp.ne.s32.totalorder %s417, %s433
      %p435 = scmp.eq.s32.totalorder %s34, 0
      %p436 = por %p434, %p435
      %p437 = scmp.le.s32.totalorder 1, %s28
      %p438 = scmp.lt.s32.totalorder %s28, 5
      %p439 = pnand %p437, %p438
      %p440 = pneg %p439
      // Predicated region
      $region9: #{tpu_custom_call.1} parent=5 // pred_check
        _
      $region10: #{tpu_custom_call.1} parent=5 // pred_check_branch
        %442 = sbr.rel (%p439) target = $region12
      $region11: #{tpu_custom_call.1} parent=5 // pred_region
        %s443 = ssub.s32 %s28, 1
        // Predicated region
        $region13: #{tpu_custom_call.1} parent=11 // pred_check
          %p444 = pneg %p347
        $region14: #{tpu_custom_call.1} parent=11 // pred_check_branch
          %446 = sbr.rel (%p444) target = $region16
        $region15: #{tpu_custom_call.1} parent=11 // pred_region
          %448 = vsyncadd [#allocation5], 0
          %s450 = sshll.u32 %s11, 4
          %s451 = int_to_ptr.vmem [resolvable:$true] %s450
          %453 = dma.vmem_to_smem %s451, 16, [#allocation3], [#allocation5]
        $region16: #{tpu_custom_call.1} parent=11 // pred_fallthru
          _
      $region12: #{tpu_custom_call.1} parent=5 // pred_fallthru
        _
      %p454 = scmp.lt.s32.totalorder %s28, 4
      // Predicated region
      $region17: #{tpu_custom_call.1} parent=5 // pred_check
        %p455 = pneg %p454
      $region18: #{tpu_custom_call.1} parent=5 // pred_check_branch
        %457 = sbr.rel (%p455) target = $region20
      $region19: #{tpu_custom_call.1} parent=5 // pred_region
        // Predicated region
        $region21: #{tpu_custom_call.1} parent=19 // pred_check
          %p458 = pneg %p60
        $region22: #{tpu_custom_call.1} parent=19 // pred_check_branch
          %460 = sbr.rel (%p458) target = $region24
        $region23: #{tpu_custom_call.1} parent=19 // pred_region
          %p461 = scmp.lt.s32.totalorder %s35, 1
          %s462 = scalar_select %p461, %s35, 1
          %s463 = smul.addr %s462, 8
          %s464 = scalar_lea.vmem %s0, %s463
        $region24: #{tpu_custom_call.1} parent=19 // pred_fallthru
          _
        // Predicated region
        $region25: #{tpu_custom_call.1} parent=19 // pred_check
          %p465 = pneg %p86
        $region26: #{tpu_custom_call.1} parent=19 // pred_check_branch
          %467 = sbr.rel (%p465) target = $region28
        $region27: #{tpu_custom_call.1} parent=19 // pred_region
          %p468 = scmp.lt.s32.totalorder %s36, 1
          %s469 = scalar_select %p468, %s36, 1
          %s470 = scalar_lea.vmem %s1, %s469
        $region28: #{tpu_custom_call.1} parent=19 // pred_fallthru
          _
        // Predicated region
        $region29: #{tpu_custom_call.1} parent=19 // pred_check
          %p471 = pneg %p112
        $region30: #{tpu_custom_call.1} parent=19 // pred_check_branch
          %473 = sbr.rel (%p471) target = $region32
        $region31: #{tpu_custom_call.1} parent=19 // pred_region
          %p474 = scmp.lt.s32.totalorder %s36, 1
          %s475 = scalar_select %p474, %s36, 1
          %s476 = scalar_lea.vmem %s2, %s475
        $region32: #{tpu_custom_call.1} parent=19 // pred_fallthru
          _
        // Predicated region
        $region33: #{tpu_custom_call.1} parent=19 // pred_check
          %p477 = pneg %p138
        $region34: #{tpu_custom_call.1} parent=19 // pred_check_branch
          %479 = sbr.rel (%p477) target = $region36
        $region35: #{tpu_custom_call.1} parent=19 // pred_region
          %p480 = scmp.lt.s32.totalorder %s36, 1
          %s481 = scalar_select %p480, %s36, 1
          %s482 = smul.addr %s481, 4
          %s483 = smul.addr %s482, 4
          %s484 = scalar_lea.vmem %s3, %s483
        $region36: #{tpu_custom_call.1} parent=19 // pred_fallthru
          _
        // Predicated region
        $region37: #{tpu_custom_call.1} parent=19 // pred_check
          %p485 = pneg %p164
        $region38: #{tpu_custom_call.1} parent=19 // pred_check_branch
          %487 = sbr.rel (%p485) target = $region40
        $region39: #{tpu_custom_call.1} parent=19 // pred_region
          %p488 = scmp.lt.s32.totalorder %s36, 1
          %s489 = scalar_select %p488, %s36, 1
          %s490 = scalar_lea.vmem %s4, %s489
        $region40: #{tpu_custom_call.1} parent=19 // pred_fallthru
          _
        // Predicated region
        $region41: #{tpu_custom_call.1} parent=19 // pred_check
          %p491 = pneg %p190
        $region42: #{tpu_custom_call.1} parent=19 // pred_check_branch
          %493 = sbr.rel (%p491) target = $region44
        $region43: #{tpu_custom_call.1} parent=19 // pred_region
          %p494 = scmp.lt.s32.totalorder %s36, 1
          %s495 = scalar_select %p494, %s36, 1
          %s496 = smul.addr %s495, 4
          %s497 = smul.addr %s496, 4
          %s498 = scalar_lea.vmem %s5, %s497
        $region44: #{tpu_custom_call.1} parent=19 // pred_fallthru
          _
        // Predicated region
        $region45: #{tpu_custom_call.1} parent=19 // pred_check
          %p499 = pneg %p216
        $region46: #{tpu_custom_call.1} parent=19 // pred_check_branch
          %501 = sbr.rel (%p499) target = $region48
        $region47: #{tpu_custom_call.1} parent=19 // pred_region
          %p502 = scmp.lt.s32.totalorder %s36, 1
          %s503 = scalar_select %p502, %s36, 1
          %s504 = scalar_lea.vmem %s6, %s503
        $region48: #{tpu_custom_call.1} parent=19 // pred_fallthru
          _
        // Predicated region
        $region49: #{tpu_custom_call.1} parent=19 // pred_check
          %p505 = pneg %p242
        $region50: #{tpu_custom_call.1} parent=19 // pred_check_branch
          %507 = sbr.rel (%p505) target = $region52
        $region51: #{tpu_custom_call.1} parent=19 // pred_region
          %p508 = scmp.lt.s32.totalorder %s36, 1
          %s509 = scalar_select %p508, %s36, 1
          %s510 = smul.addr %s509, 16
          %s511 = smul.addr %s510, 4
          %s512 = scalar_lea.vmem %s7, %s511
        $region52: #{tpu_custom_call.1} parent=19 // pred_fallthru
          _
        // Predicated region
        $region53: #{tpu_custom_call.1} parent=19 // pred_check
          %p513 = pneg %p268
        $region54: #{tpu_custom_call.1} parent=19 // pred_check_branch
          %515 = sbr.rel (%p513) target = $region56
        $region55: #{tpu_custom_call.1} parent=19 // pred_region
          %p516 = scmp.lt.s32.totalorder %s36, 1
          %s517 = scalar_select %p516, %s36, 1
          %s518 = scalar_lea.vmem %s8, %s517
        $region56: #{tpu_custom_call.1} parent=19 // pred_fallthru
          _
        // Predicated region
        $region57: #{tpu_custom_call.1} parent=19 // pred_check
          %p519 = pneg %p294
        $region58: #{tpu_custom_call.1} parent=19 // pred_check_branch
          %521 = sbr.rel (%p519) target = $region60
        $region59: #{tpu_custom_call.1} parent=19 // pred_region
          %p522 = scmp.lt.s32.totalorder %s36, 1
          %s523 = scalar_select %p522, %s36, 1
          %s524 = scalar_lea.vmem %s9, %s523
        $region60: #{tpu_custom_call.1} parent=19 // pred_fallthru
          _
        // Predicated region
        $region61: #{tpu_custom_call.1} parent=19 // pred_check
          %p525 = pneg %p320
        $region62: #{tpu_custom_call.1} parent=19 // pred_check_branch
          %527 = sbr.rel (%p525) target = $region64
        $region63: #{tpu_custom_call.1} parent=19 // pred_region
          %p528 = scmp.lt.s32.totalorder %s36, 1
          %s529 = scalar_select %p528, %s36, 1
          %s530 = scalar_lea.vmem %s10, %s529
        $region64: #{tpu_custom_call.1} parent=19 // pred_fallthru
          _
      $region20: #{tpu_custom_call.1} parent=5 // pred_fallthru
        _
      %p531 = scmp.le.s32.totalorder 1, %s28
      %p532 = scmp.lt.s32.totalorder %s28, 5
      %p533 = pnand %p531, %p532
      %p534 = pneg %p533
      // Predicated region
      $region65: #{tpu_custom_call.1} parent=5 // pred_check
        _
      $region66: #{tpu_custom_call.1} parent=5 // pred_check_branch
        %536 = sbr.rel (%p533) target = $region68
      $region67: #{tpu_custom_call.1} parent=5 // pred_region
        %s537 = ssub.s32 %s28, 1
        // Predicated region
        $region69: #{tpu_custom_call.1} parent=67 // pred_check
          %p538 = pneg %p347
        $region70: #{tpu_custom_call.1} parent=67 // pred_check_branch
          %540 = sbr.rel (%p538) target = $region72
        $region71: #{tpu_custom_call.1} parent=67 // pred_region
          %542 = dma.done [#allocation5], 16
        $region72: #{tpu_custom_call.1} parent=67 // pred_fallthru
          _
        %543 = sfence
        %p544 = scmp.lt.s32.totalorder %s37, 1
        %s545 = scalar_select %p544, %s37, 1
        %s546 = smul.addr %s545, 8
        %s547 = scalar_lea.vmem %s0, %s546
        %p548 = pneg %p66
        %p549 = pneg %p63
        %p550 = scmp.lt.s32.totalorder %s38, 1
        %s551 = scalar_select %p550, %s38, 1
        %s552 = scalar_lea.vmem %s1, %s551
        %p553 = pneg %p92
        %p554 = pneg %p89
        %p555 = scmp.lt.s32.totalorder %s38, 1
        %s556 = scalar_select %p555, %s38, 1
        %s557 = scalar_lea.vmem %s2, %s556
        %p558 = pneg %p118
        %p559 = pneg %p115
        %p560 = scmp.lt.s32.totalorder %s38, 1
        %s561 = scalar_select %p560, %s38, 1
        %s562 = smul.addr %s561, 4
        %s563 = smul.addr %s562, 4
        %s564 = scalar_lea.vmem %s3, %s563
        %p565 = pneg %p144
        %p566 = pneg %p141
        %p567 = scmp.lt.s32.totalorder %s38, 1
        %s568 = scalar_select %p567, %s38, 1
        %s569 = scalar_lea.vmem %s4, %s568
        %p570 = pneg %p170
        %p571 = pneg %p167
        %p572 = scmp.lt.s32.totalorder %s38, 1
        %s573 = scalar_select %p572, %s38, 1
        %s574 = smul.addr %s573, 4
        %s575 = smul.addr %s574, 4
        %s576 = scalar_lea.vmem %s5, %s575
        %p577 = pneg %p196
        %p578 = pneg %p193
        %p579 = scmp.lt.s32.totalorder %s38, 1
        %s580 = scalar_select %p579, %s38, 1
        %s581 = scalar_lea.vmem %s6, %s580
        %p582 = pneg %p222
        %p583 = pneg %p219
        %p584 = scmp.lt.s32.totalorder %s38, 1
        %s585 = scalar_select %p584, %s38, 1
        %s586 = smul.addr %s585, 16
        %s587 = smul.addr %s586, 4
        %s588 = scalar_lea.vmem %s7, %s587
        %p589 = pneg %p248
        %p590 = pneg %p245
        %p591 = scmp.lt.s32.totalorder %s38, 1
        %s592 = scalar_select %p591, %s38, 1
        %s593 = scalar_lea.vmem %s8, %s592
        %p594 = pneg %p274
        %p595 = pneg %p271
        %p596 = scmp.lt.s32.totalorder %s38, 1
        %s597 = scalar_select %p596, %s38, 1
        %s598 = scalar_lea.vmem %s9, %s597
        %p599 = pneg %p300
        %p600 = pneg %p297
        %p601 = scmp.lt.s32.totalorder %s38, 1
        %s602 = scalar_select %p601, %s38, 1
        %s603 = scalar_lea.vmem %s10, %s602
        %p604 = pneg %p326
        %p605 = pneg %p323
        %p606 = pneg %p347
        %p607 = pneg %p344
        %p608 = pneg %p373
        %p609 = pneg %p370
        %s610 = sand.u32 %s360, 1
        %s611 = scalar_lea.sflag [#allocation4], %s610
        %s612 = sand.u32 %s360, 1
        %s613 = smul.addr %s612, 8
        %s614 = scalar_lea.vmem [#allocation6], %s613
        %p615 = pneg %p401
        %p616 = pneg %p398
        %s617 = sand.u32 %s33, 1
        %s618 = scalar_lea.sflag [#allocation8], %s617
        %s619 = sand.u32 %s388, 1
        %s620 = smul.addr %s619, 8
        %s621 = scalar_lea.vmem [#allocation7], %s620
        %p622 = pneg %p429
        %p623 = pneg %p426
        %s624 = sand.u32 %s33, 1
        %s625 = scalar_lea.sflag [#allocation8], %s624
        %s626 = sand.u32 %s416, 1
        %s627 = smul.addr %s626, 8
        %s628 = scalar_lea.vmem [#allocation9], %s627
        %p629 = scmp.lt.s32.totalorder %s37, 1
        %s630 = scalar_select %p629, %s37, 1
        %s631 = smul.addr %s630, 8
        %s632 = scalar_lea.vmem %s0, %s631
        %p633 = scmp.lt.s32.totalorder %s38, 1
        %s634 = scalar_select %p633, %s38, 1
        %s635 = scalar_lea.vmem %s1, %s634
        %p636 = scmp.lt.s32.totalorder %s38, 1
        %s637 = scalar_select %p636, %s38, 1
        %s638 = scalar_lea.vmem %s2, %s637
        %p639 = scmp.lt.s32.totalorder %s38, 1
        %s640 = scalar_select %p639, %s38, 1
        %s641 = smul.addr %s640, 4
        %s642 = smul.addr %s641, 4
        %s643 = scalar_lea.vmem %s3, %s642
        %p644 = scmp.lt.s32.totalorder %s38, 1
        %s645 = scalar_select %p644, %s38, 1
        %s646 = scalar_lea.vmem %s4, %s645
        %p647 = scmp.lt.s32.totalorder %s38, 1
        %s648 = scalar_select %p647, %s38, 1
        %s649 = smul.addr %s648, 4
        %s650 = smul.addr %s649, 4
        %s651 = scalar_lea.vmem %s5, %s650
        %p652 = scmp.lt.s32.totalorder %s38, 1
        %s653 = scalar_select %p652, %s38, 1
        %s654 = scalar_lea.vmem %s6, %s653
        %p655 = scmp.lt.s32.totalorder %s38, 1
        %s656 = scalar_select %p655, %s38, 1
        %s657 = smul.addr %s656, 16
        %s658 = smul.addr %s657, 4
        %s659 = scalar_lea.vmem %s7, %s658
        %p660 = scmp.lt.s32.totalorder %s38, 1
        %s661 = scalar_select %p660, %s38, 1
        %s662 = scalar_lea.vmem %s8, %s661
        %p663 = scmp.lt.s32.totalorder %s38, 1
        %s664 = scalar_select %p663, %s38, 1
        %s665 = scalar_lea.vmem %s9, %s664
        %p666 = scmp.lt.s32.totalorder %s38, 1
        %s667 = scalar_select %p666, %s38, 1
        %s668 = scalar_lea.vmem %s10, %s667
        %p670 = scmp.eq.s32.totalorder %s38, 0
        // Predicated region
        $region73: #{tpu_custom_call.1} parent=67 // pred_check
          %p671 = pneg %p670
        $region74: #{tpu_custom_call.1} parent=67 // pred_check_branch
          %673 = sbr.rel (%p671) target = $region76
        $region75: #{tpu_custom_call.1} parent=67 // pred_region
          %v674 = vld [vmem:[%s632] sm:$0xff]
          %vm675 = vcmask 261120
          %676 = vst.msk [vmem:[#allocation2] sm:$0xff] %vm675, %v674
        $region76: #{tpu_custom_call.1} parent=67 // pred_fallthru
          _
        %v677 = vld [vmem:[#allocation2] sm:$0xff]
        %v678 = vld [vmem:[%s635] sm:$0x1]
        %v679 = vmul.f32 %v677, %v677
        %vm680 = vcmask 261120
        %v681 = vsel %vm680, %v679, 0.0
        %682 = vadd.xlane.f32.xlu0 %v681
        %v683 = vpop.xlane.xlu0 %682
        %v684 = vrcp.pop 32.0
        %v685 = vmul.f32 32.0, %v684
        %v686 = vsub.f32 1.0, %v685
        %v687 = vmul.f32 %v684, %v686
        %v688 = vadd.f32 %v684, %v687
        %vm689 = vweird.f32 %v684
        %v690 = vsel %vm689, %v684, %v688
        %v691 = vmul.f32 %v683, %v690
        %v692 = vadd.f32 %v691, 1e-05
        %v693 = vrsqrt.pop %v692
        %v694 = vmul.f32 %v693, %v692
        %v695 = vmul.f32 %v694, %v693
        %v696 = vmul.f32 0.5, %v695
        %v697 = vsub.f32 1.5, %v696
        %v698 = vmul.f32 %v693, %v697
        %vm699 = vweird.f32 %v692
        %vm700 = vweird.f32 %v693
        %vm701 = vmor %vm699, %vm700
        %v702 = vsel %vm701, %v693, %v698
        %v703 = vmul.f32 %v677, %v702
        %v705 = vperm.slane %v678, 0
        %v707 = vmul.f32 %v703, %v705
        %v708 = vpack.c.bf16 %v707, %v707
        %v709 = vld [vmem:[%s643] sm:$0xf]
        %v710 = vld [vmem:[%s643 + $0x4] sm:$0xf]
        %v711 = vld [vmem:[%s643 + $0x8] sm:$0xf]
        %v712 = vld [vmem:[%s643 + $0xc] sm:$0xf]
        %v713 = vld [vmem:[%s646] sm:$0x1]
        %v715 = vperm.slane %v713, 0
        %v721 = vunpack.c.l.b16 %v709
        %v722 = vunpack.c.l.b16 %v710
        %v723 = vunpack.c.l.b16 %v711
        %v724 = vunpack.c.l.b16 %v712
        %v725 = vpack.c.b16 %v722, %v721
        %v726 = vpack.c.b16 %v724, %v723
        %v730 = vsel %vm680, %v708, 0
        %732 = vmatpush.bf16.msra.mxu0 0
        %733 = vmatpush.bf16.msra.mxu0 0
        %734 = vmatpush.bf16.msra.mxu0 0
        %735 = vmatpush.bf16.msra.mxu0 0
        %736 = vmatpush.bf16.msra.mxu0 0
        %737 = vmatpush.bf16.msra.mxu0 0
        %738 = vmatpush.bf16.msra.mxu0 %v726
        %739 = vmatpush.bf16.msra.mxu0 %v725
        %740 = vmatmul.bf16.gmra.mxu0 %v730
        %v741 = vpop.f32.mrf.mxu0
        %v742 = vadd.f32 %v715, %v741
        %v743 = vpop.f32.mrf.mxu0
        %744 = vdwg.mxu0
        %746 = vrot.lane.b32.xlu0 %v742, 96
        %v747 = vpop.permute.xlu0 %746
        %749 = vst.msk [vmem:[%s621] sm:$0xff] %vm680, %v747
        %750 = vst.msk [vmem:[%s628] sm:$0xff] %vm680, %v707
        %v751 = vlaneseq
        %v752 = vshrl.u32 %v751, 7
        %v753 = vlaneseq
        %v754 = vand.u32 %v753, 127
        %vm755 = vcmp.ge.s32.totalorder %v752, %v754
        %v756 = vcvt.s32.f32 %v752
        %v757 = vadd.f32 %v756, 1.0
        %v758 = vrcp.pop %v757
        %v759 = vmul.f32 %v757, %v758
        %v760 = vsub.f32 1.0, %v759
        %v761 = vmul.f32 %v758, %v760
        %v762 = vadd.f32 %v758, %v761
        %vm763 = vweird.f32 %v757
        %vm764 = vweird.f32 %v758
        %vm765 = vmor %vm763, %vm764
        %v766 = vsel %vm765, %v758, %v762
        %v767 = vand.u32 2147483647, %v757
        %vm768 = vcmp.eq.f32.partialorder %v767, 8.507059e+37
        %v769 = vand.u32 %v757, 2147483648
        %v770 = vor.u32 1.1754944e-38, %v769
        %v771 = vsel %vm768, %v770, %v766
        %v772 = vmul.f32 1.0, %v771
        %v773 = vsel %vm755, %v772, 0.0
        %v774 = vpack.c.bf16 %v773, %v773
        %vm775 = vcmask 64512
        %v777 = vsel %vm775, %v774, 0
        %vm779 = vcmask 1043456
        %v780 = vsel %vm779, %v708, 0
        %782 = vmatpush.bf16.msra.mxu0 0
        %783 = vmatpush.bf16.msra.mxu0 0
        %784 = vmatpush.bf16.msra.mxu0 0
        %785 = vmatpush.bf16.msra.mxu0 0
        %786 = vmatpush.bf16.msra.mxu0 0
        %787 = vmatpush.bf16.msra.mxu0 0
        %788 = vmatpush.bf16.msra.mxu0 0
        %789 = vmatpush.bf16.msra.mxu0 %v780
        %790 = vmatmul.bf16.gmra.mxu0 %v777
        %v791 = vpop.f32.mrf.mxu0
        %v792 = vadd.f32 0.0, %v791
        %v793 = vpop.f32.mrf.mxu0
        %794 = vdwg.mxu0
        %v795 = vmul.f32 %v742, 0.35355338
        %v796 = vpack.c.bf16 %v795, %v795
        %v797 = vpack.c.bf16 %v742, %v742
        %v799 = vunpack.c.l.b16 %v797
        %v800 = vpack.c.b16 %v799, %v799
        %801 = vrot.lane.b32.xlu0 %v800, 96
        %v802 = vpop.permute.xlu0 %801
        %v804 = vsel %vm775, %v796, 0
        %v807 = vsel %vm775, %v802, 0
        %809 = vmatpush.bf16.xpose.msra.mxu0 0
        %810 = vmatpush.bf16.xpose.msra.mxu0 0
        %811 = vmatpush.bf16.xpose.msra.mxu0 0
        %812 = vmatpush.bf16.xpose.msra.mxu0 0
        %813 = vmatpush.bf16.xpose.msra.mxu0 0
        %814 = vmatpush.bf16.xpose.msra.mxu0 0
        %815 = vmatpush.bf16.xpose.msra.mxu0 0
        %816 = vmatpush.bf16.xpose.msra.mxu0 %v807
        %817 = vmatmul.bf16.gmra.mxu0 %v804
        %v818 = vpop.f32.mrf.mxu0
        %v819 = vadd.f32 0.0, %v818
        %v820 = vpop.f32.mrf.mxu0
        %821 = vdwg.mxu0
        %v822 = vsel %vm755, %v819, -1e+10
        %v823 = vsel %vm775, %v822, -inf
        %824 = vmax.xlane.f32.xlu0 %v823
        %v825 = vpop.xlane.xlu0 %824
        %v826 = vsub.f32 %v822, %v825
        %v827 = vmul.f32 %v826, 1.442695
        %v828 = vpow.pop %v827
        %v829 = vsel %vm775, %v828, 0.0
        %830 = vadd.xlane.f32.xlu0 %v829
        %v831 = vpop.xlane.xlu0 %830
        %v832 = vrcp.pop %v831
        %v833 = vmul.f32 %v831, %v832
        %v834 = vsub.f32 1.0, %v833
        %v835 = vmul.f32 %v832, %v834
        %v836 = vadd.f32 %v832, %v835
        %vm837 = vweird.f32 %v831
        %vm838 = vweird.f32 %v832
        %vm839 = vmor %vm837, %vm838
        %v840 = vsel %vm839, %v832, %v836
        %v841 = vand.u32 2147483647, %v831
        %vm842 = vcmp.eq.f32.partialorder %v841, 8.507059e+37
        %v843 = vand.u32 %v831, 2147483648
        %v844 = vor.u32 1.1754944e-38, %v843
        %v845 = vsel %vm842, %v844, %v840
        %v846 = vmul.f32 %v828, %v845
        %v847 = vpack.c.bf16 %v846, %v846
        %v849 = vsel %vm775, %v847, 0
        %851 = vmatpush.bf16.msra.mxu0 0
        %852 = vmatpush.bf16.msra.mxu0 0
        %853 = vmatpush.bf16.msra.mxu0 0
        %854 = vmatpush.bf16.msra.mxu0 0
        %855 = vmatpush.bf16.msra.mxu0 0
        %856 = vmatpush.bf16.msra.mxu0 0
        %857 = vmatpush.bf16.msra.mxu0 0
        %858 = vmatpush.bf16.msra.mxu0 %v780
        %859 = vmatmul.bf16.gmra.mxu0 %v849
        %v860 = vpop.f32.mrf.mxu0
        %v861 = vadd.f32 0.0, %v860
        %v862 = vpop.f32.mrf.mxu0
        %863 = vdwg.mxu0
        %v865 = vunpack.c.l.b16 %v796
        %v866 = vpack.c.b16 %v865, %v865
        %867 = vrot.lane.b32.xlu0 %v866, 120
        %v868 = vpop.permute.xlu0 %867
        %869 = vrot.lane.b32.xlu0 %v800, 88
        %v870 = vpop.permute.xlu0 %869
        %v872 = vsel %vm775, %v868, 0
        %v875 = vsel %vm775, %v870, 0
        %877 = vmatpush.bf16.xpose.msra.mxu0 0
        %878 = vmatpush.bf16.xpose.msra.mxu0 0
        %879 = vmatpush.bf16.xpose.msra.mxu0 0
        %880 = vmatpush.bf16.xpose.msra.mxu0 0
        %881 = vmatpush.bf16.xpose.msra.mxu0 0
        %882 = vmatpush.bf16.xpose.msra.mxu0 0
        %883 = vmatpush.bf16.xpose.msra.mxu0 0
        %884 = vmatpush.bf16.xpose.msra.mxu0 %v875
        %885 = vmatmul.bf16.gmra.mxu0 %v872
        %v886 = vpop.f32.mrf.mxu0
        %v887 = vadd.f32 0.0, %v886
        %v888 = vpop.f32.mrf.mxu0
        %889 = vdwg.mxu0
        %v890 = vsel %vm755, %v887, -1e+10
        %v891 = vsel %vm775, %v890, -inf
        %892 = vmax.xlane.f32.xlu0 %v891
        %v893 = vpop.xlane.xlu0 %892
        %v894 = vsub.f32 %v890, %v893
        %v895 = vmul.f32 %v894, 1.442695
        %v896 = vpow.pop %v895
        %v897 = vsel %vm775, %v896, 0.0
        %898 = vadd.xlane.f32.xlu0 %v897
        %v899 = vpop.xlane.xlu0 %898
        %v900 = vrcp.pop %v899
        %v901 = vmul.f32 %v899, %v900
        %v902 = vsub.f32 1.0, %v901
        %v903 = vmul.f32 %v900, %v902
        %v904 = vadd.f32 %v900, %v903
        %vm905 = vweird.f32 %v899
        %vm906 = vweird.f32 %v900
        %vm907 = vmor %vm905, %vm906
        %v908 = vsel %vm907, %v900, %v904
        %v909 = vand.u32 2147483647, %v899
        %vm910 = vcmp.eq.f32.partialorder %v909, 8.507059e+37
        %v911 = vand.u32 %v899, 2147483648
        %v912 = vor.u32 1.1754944e-38, %v911
        %v913 = vsel %vm910, %v912, %v908
        %v914 = vmul.f32 %v896, %v913
        %v915 = vpack.c.bf16 %v914, %v914
        %v917 = vunpack.c.l.b16 %v708
        %v918 = vpack.c.b16 %v917, %v917
        %919 = vrot.lane.b32.xlu0 %v918, 120
        %v920 = vpop.permute.xlu0 %919
        %v922 = vsel %vm775, %v915, 0
        %v925 = vsel %vm779, %v920, 0
        %927 = vmatpush.bf16.msra.mxu0 0
        %928 = vmatpush.bf16.msra.mxu0 0
        %929 = vmatpush.bf16.msra.mxu0 0
        %930 = vmatpush.bf16.msra.mxu0 0
        %931 = vmatpush.bf16.msra.mxu0 0
        %932 = vmatpush.bf16.msra.mxu0 0
        %933 = vmatpush.bf16.msra.mxu0 0
        %934 = vmatpush.bf16.msra.mxu0 %v925
        %935 = vmatmul.bf16.gmra.mxu0 %v922
        %v936 = vpop.f32.mrf.mxu0
        %v937 = vadd.f32 0.0, %v936
        %v938 = vpop.f32.mrf.mxu0
        %939 = vdwg.mxu0
        %940 = vrot.lane.b32.xlu0 %v866, 112
        %v941 = vpop.permute.xlu0 %940
        %942 = vrot.lane.b32.xlu0 %v800, 80
        %v943 = vpop.permute.xlu0 %942
        %v945 = vsel %vm775, %v941, 0
        %v948 = vsel %vm775, %v943, 0
        %950 = vmatpush.bf16.xpose.msra.mxu0 0
        %951 = vmatpush.bf16.xpose.msra.mxu0 0
        %952 = vmatpush.bf16.xpose.msra.mxu0 0
        %953 = vmatpush.bf16.xpose.msra.mxu0 0
        %954 = vmatpush.bf16.xpose.msra.mxu0 0
        %955 = vmatpush.bf16.xpose.msra.mxu0 0
        %956 = vmatpush.bf16.xpose.msra.mxu0 0
        %957 = vmatpush.bf16.xpose.msra.mxu0 %v948
        %958 = vmatmul.bf16.gmra.mxu0 %v945
        %v959 = vpop.f32.mrf.mxu0
        %v960 = vadd.f32 0.0, %v959
        %v961 = vpop.f32.mrf.mxu0
        %962 = vdwg.mxu0
        %v963 = vsel %vm755, %v960, -1e+10
        %v964 = vsel %vm775, %v963, -inf
        %965 = vmax.xlane.f32.xlu0 %v964
        %v966 = vpop.xlane.xlu0 %965
        %v967 = vsub.f32 %v963, %v966
        %v968 = vmul.f32 %v967, 1.442695
        %v969 = vpow.pop %v968
        %v970 = vsel %vm775, %v969, 0.0
        %971 = vadd.xlane.f32.xlu0 %v970
        %v972 = vpop.xlane.xlu0 %971
        %v973 = vrcp.pop %v972
        %v974 = vmul.f32 %v972, %v973
        %v975 = vsub.f32 1.0, %v974
        %v976 = vmul.f32 %v973, %v975
        %v977 = vadd.f32 %v973, %v976
        %vm978 = vweird.f32 %v972
        %vm979 = vweird.f32 %v973
        %vm980 = vmor %vm978, %vm979
        %v981 = vsel %vm980, %v973, %v977
        %v982 = vand.u32 2147483647, %v972
        %vm983 = vcmp.eq.f32.partialorder %v982, 8.507059e+37
        %v984 = vand.u32 %v972, 2147483648
        %v985 = vor.u32 1.1754944e-38, %v984
        %v986 = vsel %vm983, %v985, %v981
        %v987 = vmul.f32 %v969, %v986
        %v988 = vpack.c.bf16 %v987, %v987
        %989 = vrot.lane.b32.xlu0 %v918, 112
        %v990 = vpop.permute.xlu0 %989
        %v992 = vsel %vm775, %v988, 0
        %v995 = vsel %vm779, %v990, 0
        %997 = vmatpush.bf16.msra.mxu0 0
        %998 = vmatpush.bf16.msra.mxu0 0
        %999 = vmatpush.bf16.msra.mxu0 0
        %1000 = vmatpush.bf16.msra.mxu0 0
        %1001 = vmatpush.bf16.msra.mxu0 0
        %1002 = vmatpush.bf16.msra.mxu0 0
        %1003 = vmatpush.bf16.msra.mxu0 0
        %1004 = vmatpush.bf16.msra.mxu0 %v995
        %1005 = vmatmul.bf16.gmra.mxu0 %v992
        %v1006 = vpop.f32.mrf.mxu0
        %v1007 = vadd.f32 0.0, %v1006
        %v1008 = vpop.f32.mrf.mxu0
        %1009 = vdwg.mxu0
        %1010 = vrot.lane.b32.xlu0 %v866, 104
        %v1011 = vpop.permute.xlu0 %1010
        %1012 = vrot.lane.b32.xlu0 %v800, 72
        %v1013 = vpop.permute.xlu0 %1012
        %v1015 = vsel %vm775, %v1011, 0
        %v1018 = vsel %vm775, %v1013, 0
        %1020 = vmatpush.bf16.xpose.msra.mxu0 0
        %1021 = vmatpush.bf16.xpose.msra.mxu0 0
        %1022 = vmatpush.bf16.xpose.msra.mxu0 0
        %1023 = vmatpush.bf16.xpose.msra.mxu0 0
        %1024 = vmatpush.bf16.xpose.msra.mxu0 0
        %1025 = vmatpush.bf16.xpose.msra.mxu0 0
        %1026 = vmatpush.bf16.xpose.msra.mxu0 0
        %1027 = vmatpush.bf16.xpose.msra.mxu0 %v1018
        %1028 = vmatmul.bf16.gmra.mxu0 %v1015
        %v1029 = vpop.f32.mrf.mxu0
        %v1030 = vadd.f32 0.0, %v1029
        %v1031 = vpop.f32.mrf.mxu0
        %1032 = vdwg.mxu0
        %v1033 = vsel %vm755, %v1030, -1e+10
        %v1034 = vsel %vm775, %v1033, -inf
        %1035 = vmax.xlane.f32.xlu0 %v1034
        %v1036 = vpop.xlane.xlu0 %1035
        %v1037 = vsub.f32 %v1033, %v1036
        %v1038 = vmul.f32 %v1037, 1.442695
        %v1039 = vpow.pop %v1038
        %v1040 = vsel %vm775, %v1039, 0.0
        %1041 = vadd.xlane.f32.xlu0 %v1040
        %v1042 = vpop.xlane.xlu0 %1041
        %v1043 = vrcp.pop %v1042
        %v1044 = vmul.f32 %v1042, %v1043
        %v1045 = vsub.f32 1.0, %v1044
        %v1046 = vmul.f32 %v1043, %v1045
        %v1047 = vadd.f32 %v1043, %v1046
        %vm1048 = vweird.f32 %v1042
        %vm1049 = vweird.f32 %v1043
        %vm1050 = vmor %vm1048, %vm1049
        %v1051 = vsel %vm1050, %v1043, %v1047
        %v1052 = vand.u32 2147483647, %v1042
        %vm1053 = vcmp.eq.f32.partialorder %v1052, 8.507059e+37
        %v1054 = vand.u32 %v1042, 2147483648
        %v1055 = vor.u32 1.1754944e-38, %v1054
        %v1056 = vsel %vm1053, %v1055, %v1051
        %v1057 = vmul.f32 %v1039, %v1056
        %v1058 = vpack.c.bf16 %v1057, %v1057
        %1059 = vrot.lane.b32.xlu0 %v918, 104
        %v1060 = vpop.permute.xlu0 %1059
        %v1062 = vsel %vm775, %v1058, 0
        %v1065 = vsel %vm779, %v1060, 0
        %1067 = vmatpush.bf16.msra.mxu0 0
        %1068 = vmatpush.bf16.msra.mxu0 0
        %1069 = vmatpush.bf16.msra.mxu0 0
        %1070 = vmatpush.bf16.msra.mxu0 0
        %1071 = vmatpush.bf16.msra.mxu0 0
        %1072 = vmatpush.bf16.msra.mxu0 0
        %1073 = vmatpush.bf16.msra.mxu0 0
        %1074 = vmatpush.bf16.msra.mxu0 %v1065
        %1075 = vmatmul.bf16.gmra.mxu0 %v1062
        %v1076 = vpop.f32.mrf.mxu0
        %v1077 = vadd.f32 0.0, %v1076
        %v1078 = vpop.f32.mrf.mxu0
        %1079 = vdwg.mxu0
        %1081 = vrot.lane.b32.xlu0 %v937, 8
        %v1082 = vpop.permute.xlu0 %1081
        %1085 = vrot.lane.b32.xlu0 %v1007, 16
        %v1086 = vpop.permute.xlu0 %1085
        %1089 = vrot.lane.b32.xlu0 %v1077, 24
        %v1090 = vpop.permute.xlu0 %1089
        %v1092 = vsel %vm775, %v861, %v1082
        %vm1093 = vcmask 130048
        %v1094 = vsel %vm1093, %v1092, %v1086
        %vm1095 = vcmask 195584
        %v1096 = vsel %vm1095, %v1094, %v1090
        %v1097 = vld [vmem:[%s665] sm:$0x1]
        %v1099 = vperm.slane %v1097, 0
        %v1101 = vmul.f32 %v1099, %v707
        %v1102 = vadd.f32 %v1096, %v1101
        %v1103 = vld [vmem:[%s668] sm:$0x1]
        %v1105 = vperm.slane %v1103, 0
        %v1107 = vmul.f32 %v1105, %v792
        %v1108 = vsub.f32 %v1102, %v1107
        %s1109 = sld [smem:[#allocation3 + %s38]]
        %v1110 = vstv %s1109
        %v1111 = vmul.f32 %v1108, %v1110
        %v1112 = vld [vmem:[%s638] sm:$0x1]
        %v1114 = vperm.slane %v1112, 0
        %v1116 = vmul.f32 %v703, %v1114
        %v1117 = vpack.c.bf16 %v1116, %v1116
        %v1118 = vld [vmem:[%s651] sm:$0xf]
        %v1119 = vld [vmem:[%s651 + $0x4] sm:$0xf]
        %v1120 = vld [vmem:[%s651 + $0x8] sm:$0xf]
        %v1121 = vld [vmem:[%s651 + $0xc] sm:$0xf]
        %v1122 = vld [vmem:[%s654] sm:$0x1]
        %v1124 = vperm.slane %v1122, 0
        %v1130 = vunpack.c.l.b16 %v1118
        %v1131 = vunpack.c.l.b16 %v1119
        %v1132 = vunpack.c.l.b16 %v1120
        %v1133 = vunpack.c.l.b16 %v1121
        %v1134 = vpack.c.b16 %v1131, %v1130
        %v1135 = vpack.c.b16 %v1133, %v1132
        %v1139 = vsel %vm680, %v1117, 0
        %1141 = vmatpush.bf16.msra.mxu0 0
        %1142 = vmatpush.bf16.msra.mxu0 0
        %1143 = vmatpush.bf16.msra.mxu0 0
        %1144 = vmatpush.bf16.msra.mxu0 0
        %1145 = vmatpush.bf16.msra.mxu0 0
        %1146 = vmatpush.bf16.msra.mxu0 0
        %1147 = vmatpush.bf16.msra.mxu0 %v1135
        %1148 = vmatpush.bf16.msra.mxu0 %v1134
        %1149 = vmatmul.bf16.gmra.mxu0 %v1139
        %v1150 = vpop.f32.mrf.mxu0
        %v1151 = vadd.f32 %v1124, %v1150
        %v1152 = vpop.f32.mrf.mxu0
        %1153 = vdwg.mxu0
        %v1154 = vmax.f32 %v1151, 0.0
        %v1155 = vpack.c.bf16 %v1154, %v1154
        %v1156 = vld [vmem:[%s659] sm:$0xf]
        %v1157 = vld [vmem:[%s659 + $0x4] sm:$0xf]
        %v1158 = vld [vmem:[%s659 + $0x8] sm:$0xf]
        %v1159 = vld [vmem:[%s659 + $0xc] sm:$0xf]
        %v1160 = vld [vmem:[%s659 + $0x10] sm:$0xf]
        %v1161 = vld [vmem:[%s659 + $0x14] sm:$0xf]
        %v1162 = vld [vmem:[%s659 + $0x18] sm:$0xf]
        %v1163 = vld [vmem:[%s659 + $0x1c] sm:$0xf]
        %v1164 = vld [vmem:[%s659 + $0x20] sm:$0xf]
        %v1165 = vld [vmem:[%s659 + $0x24] sm:$0xf]
        %v1166 = vld [vmem:[%s659 + $0x28] sm:$0xf]
        %v1167 = vld [vmem:[%s659 + $0x2c] sm:$0xf]
        %v1168 = vld [vmem:[%s659 + $0x30] sm:$0xf]
        %v1169 = vld [vmem:[%s659 + $0x34] sm:$0xf]
        %v1170 = vld [vmem:[%s659 + $0x38] sm:$0xf]
        %v1171 = vld [vmem:[%s659 + $0x3c] sm:$0xf]
        %v1172 = vld [vmem:[%s662] sm:$0x1]
        %v1174 = vperm.slane %v1172, 0
        %v1192 = vunpack.c.l.b16 %v1156
        %v1193 = vunpack.c.l.b16 %v1157
        %v1194 = vunpack.c.l.b16 %v1158
        %v1195 = vunpack.c.l.b16 %v1159
        %v1196 = vunpack.c.l.b16 %v1160
        %v1197 = vunpack.c.l.b16 %v1161
        %v1198 = vunpack.c.l.b16 %v1162
        %v1199 = vunpack.c.l.b16 %v1163
        %v1200 = vunpack.c.l.b16 %v1164
        %v1201 = vunpack.c.l.b16 %v1165
        %v1202 = vunpack.c.l.b16 %v1166
        %v1203 = vunpack.c.l.b16 %v1167
        %v1204 = vunpack.c.l.b16 %v1168
        %v1205 = vunpack.c.l.b16 %v1169
        %v1206 = vunpack.c.l.b16 %v1170
        %v1207 = vunpack.c.l.b16 %v1171
        %v1208 = vpack.c.b16 %v1193, %v1192
        %v1209 = vpack.c.b16 %v1195, %v1194
        %v1210 = vpack.c.b16 %v1197, %v1196
        %v1211 = vpack.c.b16 %v1199, %v1198
        %v1212 = vpack.c.b16 %v1201, %v1200
        %v1213 = vpack.c.b16 %v1203, %v1202
        %v1214 = vpack.c.b16 %v1205, %v1204
        %v1215 = vpack.c.b16 %v1207, %v1206
        %1224 = vmatpush.bf16.msra.mxu0 %v1215
        %1225 = vmatpush.bf16.msra.mxu0 %v1214
        %1226 = vmatpush.bf16.msra.mxu0 %v1213
        %1227 = vmatpush.bf16.msra.mxu0 %v1212
        %1228 = vmatpush.bf16.msra.mxu0 %v1211
        %1229 = vmatpush.bf16.msra.mxu0 %v1210
        %1230 = vmatpush.bf16.msra.mxu0 %v1209
        %1231 = vmatpush.bf16.msra.mxu0 %v1208
        %1232 = vmatmul.bf16.gmra.mxu0 %v1155
        %v1233 = vpop.f32.mrf.mxu0
        %v1234 = vadd.f32 %v1174, %v1233
        %v1235 = vpop.f32.mrf.mxu0
        %1236 = vdwg.mxu0
        %v1237 = vadd.f32 %v1111, %v1234
        %1238 = vst.msk [vmem:[#allocation2] sm:$0xff] %vm680, %v1237
        %p1239 = scmp.eq.s32.totalorder %s38, 1
        // Predicated region
        $region77: #{tpu_custom_call.1} parent=67 // pred_check
          %p1240 = pneg %p1239
        $region78: #{tpu_custom_call.1} parent=67 // pred_check_branch
          %1242 = sbr.rel (%p1240) target = $region80
        $region79: #{tpu_custom_call.1} parent=67 // pred_region
          %1243 = vst.msk [vmem:[%s614] sm:$0xff] %vm680, %v1237
        $region80: #{tpu_custom_call.1} parent=67 // pred_fallthru
          _
        %s1244 = sand.u32 %s360, 1
        %s1245 = scalar_lea.sflag [#allocation4], %s1244
        %s1246 = sand.u32 %s360, 1
        %s1247 = smul.addr %s1246, 8
        %s1248 = scalar_lea.vmem [#allocation6], %s1247
        %s1249 = sand.u32 %s33, 1
        %s1250 = scalar_lea.sflag [#allocation8], %s1249
        %s1251 = sand.u32 %s388, 1
        %s1252 = smul.addr %s1251, 8
        %s1253 = scalar_lea.vmem [#allocation7], %s1252
        %s1254 = sand.u32 %s33, 1
        %s1255 = scalar_lea.sflag [#allocation8], %s1254
        %s1256 = sand.u32 %s416, 1
        %s1257 = smul.addr %s1256, 8
        %s1258 = scalar_lea.vmem [#allocation9], %s1257
        // Predicated region
        $region81: #{tpu_custom_call.1} parent=67 // pred_check
          %p1259 = pneg %p370
        $region82: #{tpu_custom_call.1} parent=67 // pred_check_branch
          %1261 = sbr.rel (%p1259) target = $region84
        $region83: #{tpu_custom_call.1} parent=67 // pred_region
          %1263 = vsyncadd %s1245, 0
          %s1264 = smul.addr %s37, 8
          %s1265 = scalar_lea.hbm %s12, %s1264
          %s1267 = sshll.u32 %s1248, 4
          %s1268 = int_to_ptr.vmem [resolvable:$true] %s1267
          %s1269 = sshll.u32 %s1265, 4
          %s1270 = int_to_ptr.hbm [resolvable:$true] %s1269
          %1272 = dma.vmem_to_hbm [thread:$0]  %s1268, 128, %s1270, %s1245
        $region84: #{tpu_custom_call.1} parent=67 // pred_fallthru
          _
        // Predicated region
        $region85: #{tpu_custom_call.1} parent=67 // pred_check
          %p1273 = pneg %p398
        $region86: #{tpu_custom_call.1} parent=67 // pred_check_branch
          %1275 = sbr.rel (%p1273) target = $region88
        $region87: #{tpu_custom_call.1} parent=67 // pred_region
          %1277 = vsyncadd %s1250, 0
          %s1278 = smul.addr %s38, 2
          %s1279 = sadd.s32 %s37, %s1278
          %s1280 = smul.addr %s1279, 8
          %s1281 = scalar_lea.hbm %s13, %s1280
          %s1283 = sshll.u32 %s1253, 4
          %s1284 = int_to_ptr.vmem [resolvable:$true] %s1283
          %s1285 = sshll.u32 %s1281, 4
          %s1286 = int_to_ptr.hbm [resolvable:$true] %s1285
          %1288 = dma.vmem_to_hbm [thread:$0]  %s1284, 128, %s1286, %s1250
        $region88: #{tpu_custom_call.1} parent=67 // pred_fallthru
          _
        // Predicated region
        $region89: #{tpu_custom_call.1} parent=67 // pred_check
          %p1289 = pneg %p426
        $region90: #{tpu_custom_call.1} parent=67 // pred_check_branch
          %1291 = sbr.rel (%p1289) target = $region92
        $region91: #{tpu_custom_call.1} parent=67 // pred_region
          %1293 = vsyncadd %s1255, 0
          %s1294 = smul.addr %s38, 2
          %s1295 = sadd.s32 %s37, %s1294
          %s1296 = smul.addr %s1295, 8
          %s1297 = scalar_lea.hbm %s14, %s1296
          %s1299 = sshll.u32 %s1258, 4
          %s1300 = int_to_ptr.vmem [resolvable:$true] %s1299
          %s1301 = sshll.u32 %s1297, 4
          %s1302 = int_to_ptr.hbm [resolvable:$true] %s1301
          %1304 = dma.vmem_to_hbm [thread:$0]  %s1300, 128, %s1302, %s1255
        $region92: #{tpu_custom_call.1} parent=67 // pred_fallthru
          _
      $region68: #{tpu_custom_call.1} parent=5 // pred_fallthru
        _
      %p1305 = scmp.le.s32.totalorder 2, %s28
      // Predicated region
      $region93: #{tpu_custom_call.1} parent=5 // pred_check
        %p1306 = pneg %p1305
      $region94: #{tpu_custom_call.1} parent=5 // pred_check_branch
        %1308 = sbr.rel (%p1306) target = $region96
      $region95: #{tpu_custom_call.1} parent=5 // pred_region
        %s1309 = ssub.s32 %s28, 2
        // Predicated region
        $region97: #{tpu_custom_call.1} parent=95 // pred_check
          %p1310 = pneg %p376
        $region98: #{tpu_custom_call.1} parent=95 // pred_check_branch
          %1312 = sbr.rel (%p1310) target = $region100
        $region99: #{tpu_custom_call.1} parent=95 // pred_region
          %s1313 = sand.u32 %s361, 1
          %s1314 = scalar_lea.sflag [#allocation4], %s1313
          %s1315 = sand.u32 %s361, 1
          %s1316 = smul.addr %s1315, 8
          %s1317 = scalar_lea.vmem [#allocation6], %s1316
          %1319 = dma.done %s1314, 128
        $region100: #{tpu_custom_call.1} parent=95 // pred_fallthru
          _
        // Predicated region
        $region101: #{tpu_custom_call.1} parent=95 // pred_check
          %p1320 = pneg %p404
        $region102: #{tpu_custom_call.1} parent=95 // pred_check_branch
          %1322 = sbr.rel (%p1320) target = $region104
        $region103: #{tpu_custom_call.1} parent=95 // pred_region
          %s1323 = sand.u32 %s34, 1
          %s1324 = scalar_lea.sflag [#allocation8], %s1323
          %s1325 = sand.u32 %s389, 1
          %s1326 = smul.addr %s1325, 8
          %s1327 = scalar_lea.vmem [#allocation7], %s1326
          %1329 = dma.done %s1324, 128
        $region104: #{tpu_custom_call.1} parent=95 // pred_fallthru
          _
        // Predicated region
        $region105: #{tpu_custom_call.1} parent=95 // pred_check
          %p1330 = pneg %p432
        $region106: #{tpu_custom_call.1} parent=95 // pred_check_branch
          %1332 = sbr.rel (%p1330) target = $region108
        $region107: #{tpu_custom_call.1} parent=95 // pred_region
          %s1333 = sand.u32 %s34, 1
          %s1334 = scalar_lea.sflag [#allocation8], %s1333
          %s1335 = sand.u32 %s417, 1
          %s1336 = smul.addr %s1335, 8
          %s1337 = scalar_lea.vmem [#allocation9], %s1336
          %1339 = dma.done %s1334, 128
        $region108: #{tpu_custom_call.1} parent=95 // pred_fallthru
          _
      $region96: #{tpu_custom_call.1} parent=5 // pred_fallthru
        _
    $region6: #{tpu_custom_call.1} parent=1 // loop_footer
      %s32 = sadd.s32 1, %s28
    $region7: #{tpu_custom_call.1} parent=1 // loop_footer_branch
      %27 = sbr.rel target = $region3
    $region8: #{tpu_custom_call.1} parent=1 // loop_exit
      _
    %1340 = vsyncpa [#allocation4], 1
    %s1341 = scalar_lea.sflag [#allocation4], 1
    %1342 = vsyncpa %s1341, 1
    %1343 = vsyncpa [#allocation8], 1
    %s1344 = scalar_lea.sflag [#allocation8], 1
    %1345 = vsyncpa %s1344, 1
    %1346 = vsyncpa [#allocation5], 1
    %s1347 = scalar_lea.sflag [#allocation5], 1
    %1348 = vsyncpa %s1347, 1

</llo_original>
